<compile_context>
chip_gen: v7x
topology: tpu7x:2x2x1
jax: 0.10.0
libtpu: 0.0.40
codegen_flags: <defaults>
</compile_context>

<pallas_src>
import functools
import math

import numpy as np
import jax
import jax.numpy as jnp
from jax.experimental import pallas as pl

# ---------------- configuration (small synthetic shapes) ----------------
BATCH = 2
OBS_SHAPE = (4, 16, 16)          # (C, H, W) -- PyTorch NCHW convention
ACTION_DIM = 4
HIDDEN_DIM = 32
ENCODER_FEATURE_DIM = 32
NUM_LAYERS = 2                   # conv layers in the pixel encoder
NUM_FILTERS = 8
LOG_STD_MIN = -10.0
LOG_STD_MAX = 2.0
KERNEL = 3
LN_EPS = 1e-5
OUT_W = 128                      # lane-dense packed output width


def conv_spatial_dims():
    d = (OBS_SHAPE[1] - KERNEL) // 2 + 1          # first conv: stride 2
    dims = [d]
    for _ in range(NUM_LAYERS - 1):               # remaining convs: stride 1
        d = d - KERNEL + 1
        dims.append(d)
    return tuple(dims)


def _align(x, m):
    return ((x + m - 1) // m) * m


_DIMS = conv_spatial_dims()                       # (7, 5) for the toy config
D1, D2 = _DIMS[0], _DIMS[-1]
FLAT0 = OBS_SHAPE[0] * OBS_SHAPE[1] * OBS_SHAPE[2]   # 1024  (raw obs, NCHW flat)
FLAT1 = D1 * D1 * NUM_FILTERS                        # 392   (conv1 out, (oh,ow,c))
FLAT2 = D2 * D2 * NUM_FILTERS                        # 200   (conv2 out, (oh,ow,c))

# bf16 conv slabs: weight rows [0, FLATx) + one bias row at a 16-aligned offset.
W1_BIAS_ROW = _align(FLAT0, 16)                   # 1024
W2_BIAS_ROW = _align(FLAT1, 16)                   # 400

# f32 "small" slab (fc / LayerNorm / trunk), width 32; every block 8-aligned.
SLAB_W = max(ENCODER_FEATURE_DIM, HIDDEN_DIM, 2 * ACTION_DIM)
ROW_FC = 0
ROW_FCB = _align(FLAT2, 8)                        # 200
ROW_LNG = ROW_FCB + 8                             # 208
ROW_LNB = ROW_LNG + 8                             # 216
ROW_T0 = ROW_LNB + 8                              # 224
ROW_T0B = ROW_T0 + _align(ENCODER_FEATURE_DIM, 8)  # 256
ROW_T1 = ROW_T0B + 8                              # 264
ROW_T1B = ROW_T1 + _align(HIDDEN_DIM, 8)          # 296
ROW_T2 = ROW_T1B + 8                              # 304
ROW_T2B = ROW_T2 + _align(HIDDEN_DIM, 8)          # 336
SMALL_ROWS = ROW_T2B + 8                          # 344


# ---------------- the single fused Pallas kernel (no grid) ----------------
def _actor_kernel(obs_ref, w1_ref, w2_ref, ws_ref, noise_ref, out_ref):
    f32 = jnp.float32
    bf16 = jnp.bfloat16
    A = ACTION_DIM
    E = ENCODER_FEATURE_DIM
    HID = HIDDEN_DIM

    # ---- pixel encoder: both convs as single banded GEMMs (MXU bf16 path) ----
    x = (obs_ref[...] * (1.0 / 255.0)).astype(bf16)                 # (B, 1024)
    h = jnp.dot(x, w1_ref[pl.ds(0, FLAT0), :], preferred_element_type=f32)
    h = jnp.maximum(h + w1_ref[pl.ds(W1_BIAS_ROW, 1), :].astype(f32), 0.0)  # (B, 392)

    h = jnp.dot(h.astype(bf16), w2_ref[pl.ds(0, FLAT1), :],
                preferred_element_type=f32)
    h = jnp.maximum(h + w2_ref[pl.ds(W2_BIAS_ROW, 1), :].astype(f32), 0.0)  # (B, 200)

    # ---- fc + LayerNorm + tanh (f32) ----
    h = jnp.dot(h, ws_ref[pl.ds(ROW_FC, FLAT2), pl.ds(0, E)],
                preferred_element_type=f32)
    h = h + ws_ref[pl.ds(ROW_FCB, 1), pl.ds(0, E)]                  # (B, E)
    mean = jnp.mean(h, axis=-1, keepdims=True)
    var = jnp.mean((h - mean) ** 2, axis=-1, keepdims=True)
    feat = jnp.tanh((h - mean) * jax.lax.rsqrt(var + LN_EPS)
                    * ws_ref[pl.ds(ROW_LNG, 1), pl.ds(0, E)]
                    + ws_ref[pl.ds(ROW_LNB, 1), pl.ds(0, E)])

    # ---- trunk MLP ----
    z = jnp.maximum(
        jnp.dot(feat, ws_ref[pl.ds(ROW_T0, E), pl.ds(0, HID)],
                preferred_element_type=f32)
        + ws_ref[pl.ds(ROW_T0B, 1), pl.ds(0, HID)], 0.0)
    z = jnp.maximum(
        jnp.dot(z, ws_ref[pl.ds(ROW_T1, HID), pl.ds(0, HID)],
                preferred_element_type=f32)
        + ws_ref[pl.ds(ROW_T1B, 1), pl.ds(0, HID)], 0.0)
    t = (jnp.dot(z, ws_ref[pl.ds(ROW_T2, HID), pl.ds(0, 2 * A)],
                 preferred_element_type=f32)
         + ws_ref[pl.ds(ROW_T2B, 1), pl.ds(0, 2 * A)])              # (B, 2A)

    # ---- squashed Gaussian head ----
    mu = t[:, 0:A]
    log_std = jnp.tanh(t[:, A:2 * A])
    log_std = LOG_STD_MIN + 0.5 * (LOG_STD_MAX - LOG_STD_MIN) * (log_std + 1.0)
    std = jnp.exp(log_std)
    noise = noise_ref[...]                                          # (B, A)
    pi = mu + noise * std
    log_pi = (jnp.sum(-0.5 * noise * noise - log_std, axis=-1, keepdims=True)
              - 0.5 * math.log(2.0 * math.pi) * A)
    mu_t = jnp.tanh(mu)
    pi_t = jnp.tanh(pi)
    log_pi = log_pi - jnp.sum(
        jnp.log(jnp.maximum(1.0 - pi_t * pi_t, 0.0) + 1e-6), axis=-1, keepdims=True)

    # ---- single lane-dense packed store: [mu | pi | log_std | log_pi | 0] ----
    pad = jnp.zeros((out_ref.shape[0], OUT_W - (3 * A + 1)), f32)
    out_ref[...] = jnp.concatenate([mu_t, pi_t, log_std, log_pi, pad], axis=1)


# ---------------- wrapper: one pallas_call, no grid, no XLA pre-pass ----------------
@jax.jit
def actor_forward(obs, noise, kp):
    B = obs.shape[0]
    A = ACTION_DIM
    x = obs.reshape(B, -1)        # free metadata reshape (NCHW flatten matches W1 rows)

    flops = 2 * B * (FLAT0 * FLAT1 + FLAT1 * FLAT2 + FLAT2 * ENCODER_FEATURE_DIM
                     + ENCODER_FEATURE_DIM * HIDDEN_DIM + HIDDEN_DIM * HIDDEN_DIM
                     + HIDDEN_DIM * 2 * A)
    bytes_accessed = (x.size * 4 + kp["w1"].size * 2 + kp["w2"].size * 2
                      + kp["ws"].size * 4 + noise.size * 4 + B * OUT_W * 4)
    cost = pl.CostEstimate(flops=flops,
                           transcendentals=B * (ENCODER_FEATURE_DIM + 4 * A + 2),
                           bytes_accessed=bytes_accessed)

    out = pl.pallas_call(
        _actor_kernel,
        out_shape=jax.ShapeDtypeStruct((B, OUT_W), jnp.float32),
        cost_estimate=cost,
    )(x, kp["w1"], kp["w2"], kp["ws"], noise)

    mu = out[:, 0:A]
    pi = out[:, A:2 * A]
    log_std = out[:, 2 * A:3 * A]
    log_pi = out[:, 3 * A:3 * A + 1]
    return mu, pi, log_pi, log_std


# ---------------- one-time weight repacking into the kernel layout ----------------
def prepare_kernel_params(p):
    """Pack params into: bf16 conv slabs w1 (banded GEMM, (1025,392)) and
    w2 ((401,200)), plus one f32 slab for fc/LN/trunk.  Built once at init."""
    assert NUM_LAYERS == 2, "kernel is specialised to the 2-conv-layer config"
    C, H, W = OBS_SHAPE
    nf = NUM_FILTERS
    E = ENCODER_FEATURE_DIM

    # conv1 (stride 2) as a dense banded matrix: rows = NCHW-flat obs index,
    # cols = (oh, ow, o) flat output index.
    w1 = np.asarray(p["conv_w"][0], np.float32)           # (O, I, kh, kw)
    W1 = np.zeros((FLAT0, FLAT1), np.float32)
    for di in range(KERNEL):
        for dj in range(KERNEL):
            for oh in range(D1):
                for ow in range(D1):
                    hh, ww = 2 * oh + di, 2 * ow + dj
                    col = (oh * D1 + ow) * nf
                    for c in range(C):
                        W1[c * H * W + hh * W + ww, col:col + nf] = w1[:, c, di, dj]
    assert np.count_nonzero(W1) <= FLAT1 * KERNEL * KERNEL * C   # banded structure

    # conv2 (stride 1): rows = conv1 (ih, iw, ci) flat, cols = (oh, ow, co) flat.
    w2 = np.asarray(p["conv_w"][1], np.float32)
    W2 = np.zeros((FLAT1, FLAT2), np.float32)
    for di in range(KERNEL):
        for dj in range(KERNEL):
            for oh in range(D2):
                for ow in range(D2):
                    ih, iw = oh + di, ow + dj
                    col = (oh * D2 + ow) * nf
                    for ci in range(nf):
                        W2[(ih * D1 + iw) * nf + ci, col:col + nf] = w2[:, ci, di, dj]
    assert np.count_nonzero(W2) <= FLAT2 * KERNEL * KERNEL * nf

    b1_t = np.tile(np.asarray(p["conv_b"][0], np.float32), D1 * D1)   # (392,)
    b2_t = np.tile(np.asarray(p["conv_b"][1], np.float32), D2 * D2)   # (200,)

    w1slab = np.zeros((W1_BIAS_ROW + 1, FLAT1), np.float32)
    w1slab[:FLAT0, :] = W1
    w1slab[W1_BIAS_ROW, :] = b1_t        # bias row stored bf16 too (zero at init)
    w2slab = np.zeros((W2_BIAS_ROW + 1, FLAT2), np.float32)
    w2slab[:FLAT1, :] = W2
    w2slab[W2_BIAS_ROW, :] = b2_t

    # fc weight: torch flatten order is (c, oh, ow); permute rows once to the
    # kernel's (oh, ow, c) layout so no runtime transpose is needed.
    fc_w = np.asarray(p["fc_w"], np.float32).reshape(nf, D2, D2, E)
    fc_w = fc_w.transpose(1, 2, 0, 3).reshape(D2 * D2 * nf, E)

    S = np.zeros((SMALL_ROWS, SLAB_W), np.float32)
    S[ROW_FC:ROW_FC + FLAT2, :E] = fc_w
    S[ROW_FCB, :E] = np.asarray(p["fc_b"], np.float32)
    S[ROW_LNG, :E] = np.asarray(p["ln_g"], np.float32)
    S[ROW_LNB, :E] = np.asarray(p["ln_b"], np.float32)
    S[ROW_T0:ROW_T0 + E, :HIDDEN_DIM] = np.asarray(p["trunk_w"][0], np.float32)
    S[ROW_T0B, :HIDDEN_DIM] = np.asarray(p["trunk_b"][0], np.float32)
    S[ROW_T1:ROW_T1 + HIDDEN_DIM, :HIDDEN_DIM] = np.asarray(p["trunk_w"][1], np.float32)
    S[ROW_T1B, :HIDDEN_DIM] = np.asarray(p["trunk_b"][1], np.float32)
    S[ROW_T2:ROW_T2 + HIDDEN_DIM, :2 * ACTION_DIM] = np.asarray(p["trunk_w"][2], np.float32)
    S[ROW_T2B, :2 * ACTION_DIM] = np.asarray(p["trunk_b"][2], np.float32)

    return dict(
        w1=jnp.asarray(w1slab).astype(jnp.bfloat16),
        w2=jnp.asarray(w2slab).astype(jnp.bfloat16),
        ws=jnp.asarray(S),
    )


# ---------------- pure-JAX reference (mirrors the PyTorch forward) ----------------
def reference_forward(obs, noise, p):
    """Reference Actor forward.  Conv operands are routed through bf16 exactly
    like the kernel (f32 accumulation); everything else is f32."""
    f32, bf16 = jnp.float32, jnp.bfloat16
    A = ACTION_DIM
    h = obs * (1.0 / 255.0)
    stride = 2
    for i in range(NUM_LAYERS):
        w = p["conv_w"][i].astype(bf16).astype(f32)
        h = jax.lax.conv_general_dilated(
            h.astype(bf16).astype(f32), w,
            window_strides=(stride, stride), padding="VALID",
            dimension_numbers=("NCHW", "OIHW", "NCHW"))
        h = jnp.maximum(h + p["conv_b"][i].reshape(1, -1, 1, 1), 0.0)
        stride = 1
    B = obs.shape[0]
    h = h.reshape(B, -1) @ p["fc_w"] + p["fc_b"]
    mean = jnp.mean(h, -1, keepdims=True)
    var = jnp.mean((h - mean) ** 2, -1, keepdims=True)
    feat = jnp.tanh((h - mean) * jax.lax.rsqrt(var + LN_EPS) * p["ln_g"] + p["ln_b"])
    z = jnp.maximum(feat @ p["trunk_w"][0] + p["trunk_b"][0], 0.0)
    z = jnp.maximum(z @ p["trunk_w"][1] + p["trunk_b"][1], 0.0)
    t = z @ p["trunk_w"][2] + p["trunk_b"][2]
    mu, log_std = t[:, :A], t[:, A:]
    log_std = jnp.tanh(log_std)
    log_std = LOG_STD_MIN + 0.5 * (LOG_STD_MAX - LOG_STD_MIN) * (log_std + 1.0)
    std = jnp.exp(log_std)
    pi = mu + noise * std
    log_pi = (jnp.sum(-0.5 * noise ** 2 - log_std, -1, keepdims=True)
              - 0.5 * math.log(2.0 * math.pi) * A)
    mu, pi = jnp.tanh(mu), jnp.tanh(pi)
    log_pi = log_pi - jnp.sum(
        jnp.log(jnp.maximum(1.0 - pi ** 2, 0.0) + 1e-6), -1, keepdims=True)
    return mu, pi, log_pi, log_std


# ---------------- deterministic parameter init (mirrors weight_init) ----------------
def orthogonal(key, shape, gain=1.0):
    rows, cols = shape
    n_big, n_small = max(rows, cols), min(rows, cols)
    a = jax.random.normal(key, (n_big, n_small), dtype=jnp.float32)
    q, r = jnp.linalg.qr(a)
    q = q * jnp.where(jnp.diagonal(r) >= 0, 1.0, -1.0)[None, :]
    if rows < cols:
        q = q.T
    return gain * q


def init_params(key):
    gain_relu = math.sqrt(2.0)
    keys = jax.random.split(key, NUM_LAYERS + 4)

    conv_w, conv_b = [], []
    in_ch = OBS_SHAPE[0]
    for i in range(NUM_LAYERS):
        w = jnp.zeros((NUM_FILTERS, in_ch, KERNEL, KERNEL), jnp.float32)
        center = orthogonal(keys[i], (NUM_FILTERS, in_ch), gain=gain_relu)
        w = w.at[:, :, KERNEL // 2, KERNEL // 2].set(center)
        conv_w.append(w)
        conv_b.append(jnp.zeros((NUM_FILTERS,), jnp.float32))
        in_ch = NUM_FILTERS

    flat = NUM_FILTERS * D2 * D2
    fc_w = orthogonal(keys[NUM_LAYERS], (ENCODER_FEATURE_DIM, flat)).T    # (in, out)
    fc_b = jnp.zeros((ENCODER_FEATURE_DIM,), jnp.float32)
    ln_g = jnp.ones((ENCODER_FEATURE_DIM,), jnp.float32)
    ln_b = jnp.zeros((ENCODER_FEATURE_DIM,), jnp.float32)

    trunk_dims = [(ENCODER_FEATURE_DIM, HIDDEN_DIM),
                  (HIDDEN_DIM, HIDDEN_DIM),
                  (HIDDEN_DIM, 2 * ACTION_DIM)]
    trunk_w, trunk_b = [], []
    for j, (din, dout) in enumerate(trunk_dims):
        trunk_w.append(orthogonal(keys[NUM_LAYERS + 1 + j], (dout, din)).T)  # (in, out)
        trunk_b.append(jnp.zeros((dout,), jnp.float32))

    return dict(conv_w=conv_w, conv_b=conv_b, fc_w=fc_w, fc_b=fc_b,
                ln_g=ln_g, ln_b=ln_b, trunk_w=trunk_w, trunk_b=trunk_b)


if __name__ == "__main__":
    key = jax.random.PRNGKey(0)
    pkey, okey, nkey = jax.random.split(key, 3)
    raw_params = init_params(pkey)
    kparams = prepare_kernel_params(raw_params)      # one-time weight repacking

    obs = jax.random.uniform(okey, (BATCH,) + OBS_SHAPE,
                             minval=0.0, maxval=255.0, dtype=jnp.float32)
    # torch uses randn_like(mu); Gaussian noise is passed in for determinism
    noise = jax.random.normal(nkey, (BATCH, ACTION_DIM), dtype=jnp.float32)

    mu, pi, log_pi, log_std = actor_forward(obs, noise, kparams)
    jax.block_until_ready((mu, pi, log_pi, log_std))

    assert mu.shape == (BATCH, ACTION_DIM)
    assert pi.shape == (BATCH, ACTION_DIM)
    assert log_pi.shape == (BATCH, 1)
    assert log_std.shape == (BATCH, ACTION_DIM)

    # numerics vs. pure-JAX reference (same bf16 conv rounding; tolerance only
    # absorbs accumulation-order / transcendental-impl differences).
    r_mu, r_pi, r_lp, r_ls = reference_forward(obs, noise, raw_params)
    for got, want, name in ((mu, r_mu, "mu"), (pi, r_pi, "pi"),
                            (log_pi, r_lp, "log_pi"), (log_std, r_ls, "log_std")):
        err = float(jnp.max(jnp.abs(got - want)))
        assert err < 2e-2, f"{name} mismatch vs reference: max|diff|={err}"

    print("KERNEL_OK")
</pallas_src>

<mosaic_0001>
module attributes {stable_mosaic.version = 11 : i64} {
  func.func @_actor_kernel(%arg0: memref<2x1024xf32, #tpu.memory_space<vmem>>, %arg1: memref<1025x392xbf16, #tpu.memory_space<vmem>>, %arg2: memref<401x200xbf16, #tpu.memory_space<vmem>>, %arg3: memref<344x32xf32, #tpu.memory_space<vmem>>, %arg4: memref<2x4xf32, #tpu.memory_space<vmem>>, %arg5: memref<2x128xf32, #tpu.memory_space<vmem>>) attributes {dimension_semantics = [], scalar_prefetch = 0 : i64, scratch_operands = 0 : i64, tpu.core_type = #tpu.core_type<tc>} {
    %c0 = arith.constant 0 : index
    %c0_0 = arith.constant 0 : index
    %0 = vector.load %arg0[%c0, %c0_0] : memref<2x1024xf32, #tpu.memory_space<vmem>>, vector<2x1024xf32>
    %cst = arith.constant 0.00392156886 : f32
    %1 = vector.broadcast %cst : f32 to vector<2x1024xf32>
    %2 = arith.mulf %0, %1 : vector<2x1024xf32>
    %3 = arith.truncf %2 : vector<2x1024xf32> to vector<2x1024xbf16>
    %c0_1 = arith.constant 0 : index
    %c0_2 = arith.constant 0 : index
    %4 = vector.load %arg1[%c0_1, %c0_2] : memref<1025x392xbf16, #tpu.memory_space<vmem>>, vector<1024x392xbf16>
    %cst_3 = arith.constant dense<0.000000e+00> : vector<2x392xf32>
    %5 = tpu.matmul %3, %4, %cst_3 {dimension_numbers = #tpu.dot_dimension_numbers<[1], [0], [0], [1], [0, 0, 1, 1], [], []>} : vector<2x1024xbf16>, vector<1024x392xbf16>, vector<2x392xf32> -> vector<2x392xf32>
    %c1024 = arith.constant 1024 : index
    %c0_4 = arith.constant 0 : index
    %6 = vector.load %arg1[%c1024, %c0_4] : memref<1025x392xbf16, #tpu.memory_space<vmem>>, vector<1x392xbf16>
    %7 = arith.extf %6 : vector<1x392xbf16> to vector<1x392xf32>
    %8 = vector.broadcast %7 : vector<1x392xf32> to vector<2x392xf32>
    %9 = arith.addf %5, %8 : vector<2x392xf32>
    %cst_5 = arith.constant 0.000000e+00 : f32
    %10 = vector.broadcast %cst_5 : f32 to vector<2x392xf32>
    %11 = arith.maximumf %9, %10 : vector<2x392xf32>
    %12 = arith.truncf %11 : vector<2x392xf32> to vector<2x392xbf16>
    %c0_6 = arith.constant 0 : index
    %c0_7 = arith.constant 0 : index
    %13 = vector.load %arg2[%c0_6, %c0_7] : memref<401x200xbf16, #tpu.memory_space<vmem>>, vector<392x200xbf16>
    %cst_8 = arith.constant dense<0.000000e+00> : vector<2x200xf32>
    %14 = tpu.matmul %12, %13, %cst_8 {dimension_numbers = #tpu.dot_dimension_numbers<[1], [0], [0], [1], [0, 0, 1, 1], [], []>} : vector<2x392xbf16>, vector<392x200xbf16>, vector<2x200xf32> -> vector<2x200xf32>
    %c400 = arith.constant 400 : index
    %c0_9 = arith.constant 0 : index
    %15 = vector.load %arg2[%c400, %c0_9] : memref<401x200xbf16, #tpu.memory_space<vmem>>, vector<1x200xbf16>
    %16 = arith.extf %15 : vector<1x200xbf16> to vector<1x200xf32>
    %17 = vector.broadcast %16 : vector<1x200xf32> to vector<2x200xf32>
    %18 = arith.addf %14, %17 : vector<2x200xf32>
    %cst_10 = arith.constant 0.000000e+00 : f32
    %19 = vector.broadcast %cst_10 : f32 to vector<2x200xf32>
    %20 = arith.maximumf %18, %19 : vector<2x200xf32>
    %c0_11 = arith.constant 0 : index
    %c0_12 = arith.constant 0 : index
    %21 = vector.load %arg3[%c0_11, %c0_12] : memref<344x32xf32, #tpu.memory_space<vmem>>, vector<200x32xf32>
    %cst_13 = arith.constant dense<0.000000e+00> : vector<2x32xf32>
    %22 = tpu.matmul %20, %21, %cst_13 {dimension_numbers = #tpu.dot_dimension_numbers<[1], [0], [0], [1], [0, 0, 1, 1], [], []>} : vector<2x200xf32>, vector<200x32xf32>, vector<2x32xf32> -> vector<2x32xf32>
    %c200 = arith.constant 200 : index
    %c0_14 = arith.constant 0 : index
    %23 = vector.load %arg3[%c200, %c0_14] : memref<344x32xf32, #tpu.memory_space<vmem>>, vector<1x32xf32>
    %24 = vector.broadcast %23 : vector<1x32xf32> to vector<2x32xf32>
    %25 = arith.addf %22, %24 : vector<2x32xf32>
    %cst_15 = arith.constant dense<0.000000e+00> : vector<2xf32>
    %26 = vector.multi_reduction <add>, %25, %cst_15 [1] : vector<2x32xf32> to vector<2xf32>
    %27 = vector.shape_cast %26 : vector<2xf32> to vector<2x1xf32>
    %cst_16 = arith.constant 3.200000e+01 : f32
    %28 = vector.broadcast %cst_16 : f32 to vector<2x1xf32>
    %29 = arith.divf %27, %28 : vector<2x1xf32>
    %30 = vector.broadcast %29 : vector<2x1xf32> to vector<2x32xf32>
    %31 = arith.subf %25, %30 : vector<2x32xf32>
    %32 = arith.mulf %31, %31 : vector<2x32xf32>
    %cst_17 = arith.constant dense<0.000000e+00> : vector<2xf32>
    %33 = vector.multi_reduction <add>, %32, %cst_17 [1] : vector<2x32xf32> to vector<2xf32>
    %34 = vector.shape_cast %33 : vector<2xf32> to vector<2x1xf32>
    %cst_18 = arith.constant 3.200000e+01 : f32
    %35 = vector.broadcast %cst_18 : f32 to vector<2x1xf32>
    %36 = arith.divf %34, %35 : vector<2x1xf32>
    %37 = vector.broadcast %29 : vector<2x1xf32> to vector<2x32xf32>
    %38 = arith.subf %25, %37 : vector<2x32xf32>
    %cst_19 = arith.constant 9.99999974E-6 : f32
    %39 = vector.broadcast %cst_19 : f32 to vector<2x1xf32>
    %40 = arith.addf %36, %39 : vector<2x1xf32>
    %41 = math.rsqrt %40 : vector<2x1xf32>
    %42 = vector.broadcast %41 : vector<2x1xf32> to vector<2x32xf32>
    %43 = arith.mulf %38, %42 : vector<2x32xf32>
    %c208 = arith.constant 208 : index
    %c0_20 = arith.constant 0 : index
    %44 = vector.load %arg3[%c208, %c0_20] : memref<344x32xf32, #tpu.memory_space<vmem>>, vector<1x32xf32>
    %45 = vector.broadcast %44 : vector<1x32xf32> to vector<2x32xf32>
    %46 = arith.mulf %43, %45 : vector<2x32xf32>
    %c216 = arith.constant 216 : index
    %c0_21 = arith.constant 0 : index
    %47 = vector.load %arg3[%c216, %c0_21] : memref<344x32xf32, #tpu.memory_space<vmem>>, vector<1x32xf32>
    %48 = vector.broadcast %47 : vector<1x32xf32> to vector<2x32xf32>
    %49 = arith.addf %46, %48 : vector<2x32xf32>
    %50 = math.tanh %49 : vector<2x32xf32>
    %c224 = arith.constant 224 : index
    %c0_22 = arith.constant 0 : index
    %51 = vector.load %arg3[%c224, %c0_22] : memref<344x32xf32, #tpu.memory_space<vmem>>, vector<32x32xf32>
    %cst_23 = arith.constant dense<0.000000e+00> : vector<2x32xf32>
    %52 = tpu.matmul %50, %51, %cst_23 {dimension_numbers = #tpu.dot_dimension_numbers<[1], [0], [0], [1], [0, 0, 1, 1], [], []>} : vector<2x32xf32>, vector<32x32xf32>, vector<2x32xf32> -> vector<2x32xf32>
    %c256 = arith.constant 256 : index
    %c0_24 = arith.constant 0 : index
    %53 = vector.load %arg3[%c256, %c0_24] : memref<344x32xf32, #tpu.memory_space<vmem>>, vector<1x32xf32>
    %54 = vector.broadcast %53 : vector<1x32xf32> to vector<2x32xf32>
    %55 = arith.addf %52, %54 : vector<2x32xf32>
    %cst_25 = arith.constant 0.000000e+00 : f32
    %56 = vector.broadcast %cst_25 : f32 to vector<2x32xf32>
    %57 = arith.maximumf %55, %56 : vector<2x32xf32>
    %c264 = arith.constant 264 : index
    %c0_26 = arith.constant 0 : index
    %58 = vector.load %arg3[%c264, %c0_26] : memref<344x32xf32, #tpu.memory_space<vmem>>, vector<32x32xf32>
    %cst_27 = arith.constant dense<0.000000e+00> : vector<2x32xf32>
    %59 = tpu.matmul %57, %58, %cst_27 {dimension_numbers = #tpu.dot_dimension_numbers<[1], [0], [0], [1], [0, 0, 1, 1], [], []>} : vector<2x32xf32>, vector<32x32xf32>, vector<2x32xf32> -> vector<2x32xf32>
    %c296 = arith.constant 296 : index
    %c0_28 = arith.constant 0 : index
    %60 = vector.load %arg3[%c296, %c0_28] : memref<344x32xf32, #tpu.memory_space<vmem>>, vector<1x32xf32>
    %61 = vector.broadcast %60 : vector<1x32xf32> to vector<2x32xf32>
    %62 = arith.addf %59, %61 : vector<2x32xf32>
    %cst_29 = arith.constant 0.000000e+00 : f32
    %63 = vector.broadcast %cst_29 : f32 to vector<2x32xf32>
    %64 = arith.maximumf %62, %63 : vector<2x32xf32>
    %c304 = arith.constant 304 : index
    %c0_30 = arith.constant 0 : index
    %65 = vector.load %arg3[%c304, %c0_30] : memref<344x32xf32, #tpu.memory_space<vmem>>, vector<32x8xf32>
    %cst_31 = arith.constant dense<0.000000e+00> : vector<2x8xf32>
    %66 = tpu.matmul %64, %65, %cst_31 {dimension_numbers = #tpu.dot_dimension_numbers<[1], [0], [0], [1], [0, 0, 1, 1], [], []>} : vector<2x32xf32>, vector<32x8xf32>, vector<2x8xf32> -> vector<2x8xf32>
    %c336 = arith.constant 336 : index
    %c0_32 = arith.constant 0 : index
    %67 = vector.load %arg3[%c336, %c0_32] : memref<344x32xf32, #tpu.memory_space<vmem>>, vector<1x8xf32>
    %68 = vector.broadcast %67 : vector<1x8xf32> to vector<2x8xf32>
    %69 = arith.addf %66, %68 : vector<2x8xf32>
    %70 = vector.extract_strided_slice %69 {offsets = [0, 0], sizes = [2, 4], strides = [1, 1]} : vector<2x8xf32> to vector<2x4xf32>
    %71 = vector.extract_strided_slice %69 {offsets = [0, 4], sizes = [2, 4], strides = [1, 1]} : vector<2x8xf32> to vector<2x4xf32>
    %72 = math.tanh %71 : vector<2x4xf32>
    %cst_33 = arith.constant 1.000000e+00 : f32
    %73 = vector.broadcast %cst_33 : f32 to vector<2x4xf32>
    %74 = arith.addf %72, %73 : vector<2x4xf32>
    %cst_34 = arith.constant 6.000000e+00 : f32
    %75 = vector.broadcast %cst_34 : f32 to vector<2x4xf32>
    %76 = arith.mulf %75, %74 : vector<2x4xf32>
    %cst_35 = arith.constant -1.000000e+01 : f32
    %77 = vector.broadcast %cst_35 : f32 to vector<2x4xf32>
    %78 = arith.addf %77, %76 : vector<2x4xf32>
    %79 = math.exp %78 : vector<2x4xf32>
    %c0_36 = arith.constant 0 : index
    %c0_37 = arith.constant 0 : index
    %80 = vector.load %arg4[%c0_36, %c0_37] : memref<2x4xf32, #tpu.memory_space<vmem>>, vector<2x4xf32>
    %81 = arith.mulf %80, %79 : vector<2x4xf32>
    %82 = arith.addf %70, %81 : vector<2x4xf32>
    %cst_38 = arith.constant -5.000000e-01 : f32
    %83 = vector.broadcast %cst_38 : f32 to vector<2x4xf32>
    %84 = arith.mulf %83, %80 : vector<2x4xf32>
    %85 = arith.mulf %84, %80 : vector<2x4xf32>
    %86 = arith.subf %85, %78 : vector<2x4xf32>
    %cst_39 = arith.constant dense<0.000000e+00> : vector<2xf32>
    %87 = vector.multi_reduction <add>, %86, %cst_39 [1] : vector<2x4xf32> to vector<2xf32>
    %88 = vector.shape_cast %87 : vector<2xf32> to vector<2x1xf32>
    %cst_40 = arith.constant 3.67575407 : f32
    %89 = vector.broadcast %cst_40 : f32 to vector<2x1xf32>
    %90 = arith.subf %88, %89 : vector<2x1xf32>
    %91 = math.tanh %70 : vector<2x4xf32>
    %92 = math.tanh %82 : vector<2x4xf32>
    %93 = arith.mulf %92, %92 : vector<2x4xf32>
    %cst_41 = arith.constant 1.000000e+00 : f32
    %94 = vector.broadcast %cst_41 : f32 to vector<2x4xf32>
    %95 = arith.subf %94, %93 : vector<2x4xf32>
    %cst_42 = arith.constant 0.000000e+00 : f32
    %96 = vector.broadcast %cst_42 : f32 to vector<2x4xf32>
    %97 = arith.maximumf %95, %96 : vector<2x4xf32>
    %cst_43 = arith.constant 9.99999997E-7 : f32
    %98 = vector.broadcast %cst_43 : f32 to vector<2x4xf32>
    %99 = arith.addf %97, %98 : vector<2x4xf32>
    %100 = math.log %99 : vector<2x4xf32>
    %cst_44 = arith.constant dense<0.000000e+00> : vector<2xf32>
    %101 = vector.multi_reduction <add>, %100, %cst_44 [1] : vector<2x4xf32> to vector<2xf32>
    %102 = vector.shape_cast %101 : vector<2xf32> to vector<2x1xf32>
    %103 = arith.subf %90, %102 : vector<2x1xf32>
    %cst_45 = arith.constant 0.000000e+00 : f32
    %104 = vector.broadcast %cst_45 : f32 to vector<2x115xf32>
    %105 = tpu.concatenate %91, %92, %78, %103, %104 in 1 : vector<2x4xf32>, vector<2x4xf32>, vector<2x4xf32>, vector<2x1xf32>, vector<2x115xf32> -> vector<2x128xf32>
    %c0_46 = arith.constant 0 : index
    %c0_47 = arith.constant 0 : index
    %106 = vector.load %arg5[%c0_46, %c0_47] : memref<2x128xf32, #tpu.memory_space<vmem>>, vector<2x128xf32>
    tpu.vector_store %arg5[%c0_46, %c0_47], %105 {strides = array<i32>} : memref<2x128xf32, #tpu.memory_space<vmem>>, vector<2x128xf32>,
    return
  }
}

</mosaic_0001>

<llo_original>
// kernel: actor_forward.1
$region0: #{actor_forward.1}
  #allocation0 [shape = 'u32[]', space=smem, size = 0x4, offset = 0x4, fixed_abs, tag = 'smem constant byte address 0x4 - core index']
  #allocation1 [shape = 'u32[144,128]{1,0:T(1,128)}', space=vmem, size = 0x12000, scoped, tag = 'internal scratch']
  %s0 = inlined_call_operand.vmem [shape: f32[2,1024], index: 0, kind: input, shape index: {}]
  %s1 = inlined_call_operand.vmem [shape: bf16[1025,392], index: 1, kind: input, shape index: {}]
  %s2 = inlined_call_operand.vmem [shape: bf16[401,200], index: 2, kind: input, shape index: {}]
  %s3 = inlined_call_operand.vmem [shape: f32[344,32], index: 3, kind: input, shape index: {}]
  %s4 = inlined_call_operand.vmem [shape: f32[2,4], index: 4, kind: input, shape index: {}]
  %s5 = inlined_call_operand.vmem [shape: f32[2,128], index: 5, kind: output, shape index: {}]
  %s6 = sld [smem:[#allocation0]]
  $region30: #{actor_forward.1} parent=0
    _
  %s8 = ssub.s32 1, %s6
  %s9 = scalar_select 0, %s8, %s6
  // Predicated region
  $region2: #{actor_forward.1} parent=0 // pred_check
    _
  $region3: #{actor_forward.1} parent=0 // pred_check_branch
    %11 = sbr.rel (0) target = $region5
  $region4: #{actor_forward.1} parent=0 // pred_region
    _
  $region5: #{actor_forward.1} parent=0 // pred_fallthru
    _
  // Predicated region
  $region6: #{actor_forward.1} parent=0 // pred_check
    _
  $region7: #{actor_forward.1} parent=0 // pred_check_branch
    %13 = sbr.rel (0) target = $region9
  $region8: #{actor_forward.1} parent=0 // pred_region
    _
  $region9: #{actor_forward.1} parent=0 // pred_fallthru
    _
  // Predicated region
  $region10: #{actor_forward.1} parent=0 // pred_check
    _
  $region11: #{actor_forward.1} parent=0 // pred_check_branch
    %15 = sbr.rel (0) target = $region13
  $region12: #{actor_forward.1} parent=0 // pred_region
    _
  $region13: #{actor_forward.1} parent=0 // pred_fallthru
    _
  // Predicated region
  $region14: #{actor_forward.1} parent=0 // pred_check
    _
  $region15: #{actor_forward.1} parent=0 // pred_check_branch
    %17 = sbr.rel (0) target = $region17
  $region16: #{actor_forward.1} parent=0 // pred_region
    _
  $region17: #{actor_forward.1} parent=0 // pred_fallthru
    _
  // Predicated region
  $region18: #{actor_forward.1} parent=0 // pred_check
    _
  $region19: #{actor_forward.1} parent=0 // pred_check_branch
    %19 = sbr.rel (0) target = $region21
  $region20: #{actor_forward.1} parent=0 // pred_region
    _
  $region21: #{actor_forward.1} parent=0 // pred_fallthru
    _
  %v21 = vld [vmem:[%s0] sm:$0xff]
  %v22 = vld [vmem:[%s0 + $0x8] sm:$0xff]
  %v23 = vmul.f32 %v21, 0.003921569
  %v24 = vmul.f32 %v22, 0.003921569
  %v27 = vcombine.high %v23, %v23
  %v29 = vunpack.c.l.s4 1983009808
  %v30 = vunpack.c.0.s8 %v29
  %v31 = vlaneseq
  %v32 = vshrl.u32 %v31, 7
  %v33 = vsub.s32 %v30, %v32
  %v34 = vrot.slane %v23, %v33
  %v36 = vunpack.c.l.s4 1983009808
  %v37 = vunpack.c.0.s8 %v36
  %v38 = vlaneseq
  %v39 = vshrl.u32 %v38, 7
  %v40 = vsub.s32 %v37, %v39
  %v41 = vrot.slane %v27, %v40
  %v42 = vcombine.high %v34, %v34
  %v43 = vcombine.high %v41, %v41
  %v44 = vcombine.high %v24, %v24
  %v46 = vunpack.c.l.s4 1983009808
  %v47 = vunpack.c.0.s8 %v46
  %v48 = vlaneseq
  %v49 = vshrl.u32 %v48, 7
  %v50 = vsub.s32 %v47, %v49
  %v51 = vrot.slane %v24, %v50
  %v53 = vunpack.c.l.s4 1983009808
  %v54 = vunpack.c.0.s8 %v53
  %v55 = vlaneseq
  %v56 = vshrl.u32 %v55, 7
  %v57 = vsub.s32 %v54, %v56
  %v58 = vrot.slane %v44, %v57
  %v59 = vcombine.high %v51, %v51
  %v60 = vcombine.high %v58, %v58
  %v69 = vpack.c.bf16 %v34, %v34
  %v70 = vpack.c.bf16 %v42, %v42
  %v71 = vpack.c.bf16 %v41, %v41
  %v72 = vpack.c.bf16 %v43, %v43
  %v73 = vpack.c.bf16 %v51, %v51
  %v74 = vpack.c.bf16 %v59, %v59
  %v75 = vpack.c.bf16 %v58, %v58
  %v76 = vpack.c.bf16 %v60, %v60
  %v77 = vld [vmem:[%s1] sm:$0xff]
  %v78 = vld [vmem:[%s1 + $0x8] sm:$0xff]
  %v79 = vld [vmem:[%s1 + $0x10] sm:$0xff]
  %v80 = vld [vmem:[%s1 + $0x18] sm:$0xff]
  %v81 = vld [vmem:[%s1 + $0x20] sm:$0xff]
  %v82 = vld [vmem:[%s1 + $0x28] sm:$0xff]
  %v83 = vld [vmem:[%s1 + $0x30] sm:$0xff]
  %v84 = vld [vmem:[%s1 + $0x38] sm:$0xff]
  %v85 = vld [vmem:[%s1 + $0x40] sm:$0xff]
  %v86 = vld [vmem:[%s1 + $0x48] sm:$0xff]
  %v87 = vld [vmem:[%s1 + $0x50] sm:$0xff]
  %v88 = vld [vmem:[%s1 + $0x58] sm:$0xff]
  %v89 = vld [vmem:[%s1 + $0x60] sm:$0xff]
  %v90 = vld [vmem:[%s1 + $0x68] sm:$0xff]
  %v91 = vld [vmem:[%s1 + $0x70] sm:$0xff]
  %v92 = vld [vmem:[%s1 + $0x78] sm:$0xff]
  %v93 = vld [vmem:[%s1 + $0x80] sm:$0xff]
  %v94 = vld [vmem:[%s1 + $0x88] sm:$0xff]
  %v95 = vld [vmem:[%s1 + $0x90] sm:$0xff]
  %v96 = vld [vmem:[%s1 + $0x98] sm:$0xff]
  %v97 = vld [vmem:[%s1 + $0xa0] sm:$0xff]
  %v98 = vld [vmem:[%s1 + $0xa8] sm:$0xff]
  %v99 = vld [vmem:[%s1 + $0xb0] sm:$0xff]
  %v100 = vld [vmem:[%s1 + $0xb8] sm:$0xff]
  %v101 = vld [vmem:[%s1 + $0xc0] sm:$0xff]
  %v102 = vld [vmem:[%s1 + $0xc8] sm:$0xff]
  %v103 = vld [vmem:[%s1 + $0xd0] sm:$0xff]
  %v104 = vld [vmem:[%s1 + $0xd8] sm:$0xff]
  %v105 = vld [vmem:[%s1 + $0xe0] sm:$0xff]
  %v106 = vld [vmem:[%s1 + $0xe8] sm:$0xff]
  %v107 = vld [vmem:[%s1 + $0xf0] sm:$0xff]
  %v108 = vld [vmem:[%s1 + $0xf8] sm:$0xff]
  %v109 = vld [vmem:[%s1 + $0x100] sm:$0xff]
  %v110 = vld [vmem:[%s1 + $0x108] sm:$0xff]
  %v111 = vld [vmem:[%s1 + $0x110] sm:$0xff]
  %v112 = vld [vmem:[%s1 + $0x118] sm:$0xff]
  %v113 = vld [vmem:[%s1 + $0x120] sm:$0xff]
  %v114 = vld [vmem:[%s1 + $0x128] sm:$0xff]
  %v115 = vld [vmem:[%s1 + $0x130] sm:$0xff]
  %v116 = vld [vmem:[%s1 + $0x138] sm:$0xff]
  %v117 = vld [vmem:[%s1 + $0x140] sm:$0xff]
  %v118 = vld [vmem:[%s1 + $0x148] sm:$0xff]
  %v119 = vld [vmem:[%s1 + $0x150] sm:$0xff]
  %v120 = vld [vmem:[%s1 + $0x158] sm:$0xff]
  %v121 = vld [vmem:[%s1 + $0x160] sm:$0xff]
  %v122 = vld [vmem:[%s1 + $0x168] sm:$0xff]
  %v123 = vld [vmem:[%s1 + $0x170] sm:$0xff]
  %v124 = vld [vmem:[%s1 + $0x178] sm:$0xff]
  %v125 = vld [vmem:[%s1 + $0x180] sm:$0xff]
  %v126 = vld [vmem:[%s1 + $0x188] sm:$0xff]
  %v127 = vld [vmem:[%s1 + $0x190] sm:$0xff]
  %v128 = vld [vmem:[%s1 + $0x198] sm:$0xff]
  %v129 = vld [vmem:[%s1 + $0x1a0] sm:$0xff]
  %v130 = vld [vmem:[%s1 + $0x1a8] sm:$0xff]
  %v131 = vld [vmem:[%s1 + $0x1b0] sm:$0xff]
  %v132 = vld [vmem:[%s1 + $0x1b8] sm:$0xff]
  %v133 = vld [vmem:[%s1 + $0x1c0] sm:$0xff]
  %v134 = vld [vmem:[%s1 + $0x1c8] sm:$0xff]
  %v135 = vld [vmem:[%s1 + $0x1d0] sm:$0xff]
  %v136 = vld [vmem:[%s1 + $0x1d8] sm:$0xff]
  %v137 = vld [vmem:[%s1 + $0x1e0] sm:$0xff]
  %v138 = vld [vmem:[%s1 + $0x1e8] sm:$0xff]
  %v139 = vld [vmem:[%s1 + $0x1f0] sm:$0xff]
  %v140 = vld [vmem:[%s1 + $0x1f8] sm:$0xff]
  %v141 = vld [vmem:[%s1 + $0x200] sm:$0xff]
  %v142 = vld [vmem:[%s1 + $0x208] sm:$0xff]
  %v143 = vld [vmem:[%s1 + $0x210] sm:$0xff]
  %v144 = vld [vmem:[%s1 + $0x218] sm:$0xff]
  %v145 = vld [vmem:[%s1 + $0x220] sm:$0xff]
  %v146 = vld [vmem:[%s1 + $0x228] sm:$0xff]
  %v147 = vld [vmem:[%s1 + $0x230] sm:$0xff]
  %v148 = vld [vmem:[%s1 + $0x238] sm:$0xff]
  %v149 = vld [vmem:[%s1 + $0x240] sm:$0xff]
  %v150 = vld [vmem:[%s1 + $0x248] sm:$0xff]
  %v151 = vld [vmem:[%s1 + $0x250] sm:$0xff]
  %v152 = vld [vmem:[%s1 + $0x258] sm:$0xff]
  %v153 = vld [vmem:[%s1 + $0x260] sm:$0xff]
  %v154 = vld [vmem:[%s1 + $0x268] sm:$0xff]
  %v155 = vld [vmem:[%s1 + $0x270] sm:$0xff]
  %v156 = vld [vmem:[%s1 + $0x278] sm:$0xff]
  %v157 = vld [vmem:[%s1 + $0x280] sm:$0xff]
  %v158 = vld [vmem:[%s1 + $0x288] sm:$0xff]
  %v159 = vld [vmem:[%s1 + $0x290] sm:$0xff]
  %v160 = vld [vmem:[%s1 + $0x298] sm:$0xff]
  %v161 = vld [vmem:[%s1 + $0x2a0] sm:$0xff]
  %v162 = vld [vmem:[%s1 + $0x2a8] sm:$0xff]
  %v163 = vld [vmem:[%s1 + $0x2b0] sm:$0xff]
  %v164 = vld [vmem:[%s1 + $0x2b8] sm:$0xff]
  %v165 = vld [vmem:[%s1 + $0x2c0] sm:$0xff]
  %v166 = vld [vmem:[%s1 + $0x2c8] sm:$0xff]
  %v167 = vld [vmem:[%s1 + $0x2d0] sm:$0xff]
  %v168 = vld [vmem:[%s1 + $0x2d8] sm:$0xff]
  %v169 = vld [vmem:[%s1 + $0x2e0] sm:$0xff]
  %v170 = vld [vmem:[%s1 + $0x2e8] sm:$0xff]
  %v171 = vld [vmem:[%s1 + $0x2f0] sm:$0xff]
  %v172 = vld [vmem:[%s1 + $0x2f8] sm:$0xff]
  %v173 = vld [vmem:[%s1 + $0x300] sm:$0xff]
  %v174 = vld [vmem:[%s1 + $0x308] sm:$0xff]
  %v175 = vld [vmem:[%s1 + $0x310] sm:$0xff]
  %v176 = vld [vmem:[%s1 + $0x318] sm:$0xff]
  %v177 = vld [vmem:[%s1 + $0x320] sm:$0xff]
  %v178 = vld [vmem:[%s1 + $0x328] sm:$0xff]
  %v179 = vld [vmem:[%s1 + $0x330] sm:$0xff]
  %v180 = vld [vmem:[%s1 + $0x338] sm:$0xff]
  %v181 = vld [vmem:[%s1 + $0x340] sm:$0xff]
  %v182 = vld [vmem:[%s1 + $0x348] sm:$0xff]
  %v183 = vld [vmem:[%s1 + $0x350] sm:$0xff]
  %v184 = vld [vmem:[%s1 + $0x358] sm:$0xff]
  %v185 = vld [vmem:[%s1 + $0x360] sm:$0xff]
  %v186 = vld [vmem:[%s1 + $0x368] sm:$0xff]
  %v187 = vld [vmem:[%s1 + $0x370] sm:$0xff]
  %v188 = vld [vmem:[%s1 + $0x378] sm:$0xff]
  %v189 = vld [vmem:[%s1 + $0x380] sm:$0xff]
  %v190 = vld [vmem:[%s1 + $0x388] sm:$0xff]
  %v191 = vld [vmem:[%s1 + $0x390] sm:$0xff]
  %v192 = vld [vmem:[%s1 + $0x398] sm:$0xff]
  %v193 = vld [vmem:[%s1 + $0x3a0] sm:$0xff]
  %v194 = vld [vmem:[%s1 + $0x3a8] sm:$0xff]
  %v195 = vld [vmem:[%s1 + $0x3b0] sm:$0xff]
  %v196 = vld [vmem:[%s1 + $0x3b8] sm:$0xff]
  %v197 = vld [vmem:[%s1 + $0x3c0] sm:$0xff]
  %v198 = vld [vmem:[%s1 + $0x3c8] sm:$0xff]
  %v199 = vld [vmem:[%s1 + $0x3d0] sm:$0xff]
  %v200 = vld [vmem:[%s1 + $0x3d8] sm:$0xff]
  %v201 = vld [vmem:[%s1 + $0x3e0] sm:$0xff]
  %v202 = vld [vmem:[%s1 + $0x3e8] sm:$0xff]
  %v203 = vld [vmem:[%s1 + $0x3f0] sm:$0xff]
  %v204 = vld [vmem:[%s1 + $0x3f8] sm:$0xff]
  %v205 = vld [vmem:[%s1 + $0x400] sm:$0xff]
  %v206 = vld [vmem:[%s1 + $0x408] sm:$0xff]
  %v207 = vld [vmem:[%s1 + $0x410] sm:$0xff]
  %v208 = vld [vmem:[%s1 + $0x418] sm:$0xff]
  %v209 = vld [vmem:[%s1 + $0x420] sm:$0xff]
  %v210 = vld [vmem:[%s1 + $0x428] sm:$0xff]
  %v211 = vld [vmem:[%s1 + $0x430] sm:$0xff]
  %v212 = vld [vmem:[%s1 + $0x438] sm:$0xff]
  %v213 = vld [vmem:[%s1 + $0x440] sm:$0xff]
  %v214 = vld [vmem:[%s1 + $0x448] sm:$0xff]
  %v215 = vld [vmem:[%s1 + $0x450] sm:$0xff]
  %v216 = vld [vmem:[%s1 + $0x458] sm:$0xff]
  %v217 = vld [vmem:[%s1 + $0x460] sm:$0xff]
  %v218 = vld [vmem:[%s1 + $0x468] sm:$0xff]
  %v219 = vld [vmem:[%s1 + $0x470] sm:$0xff]
  %v220 = vld [vmem:[%s1 + $0x478] sm:$0xff]
  %v221 = vld [vmem:[%s1 + $0x480] sm:$0xff]
  %v222 = vld [vmem:[%s1 + $0x488] sm:$0xff]
  %v223 = vld [vmem:[%s1 + $0x490] sm:$0xff]
  %v224 = vld [vmem:[%s1 + $0x498] sm:$0xff]
  %v225 = vld [vmem:[%s1 + $0x4a0] sm:$0xff]
  %v226 = vld [vmem:[%s1 + $0x4a8] sm:$0xff]
  %v227 = vld [vmem:[%s1 + $0x4b0] sm:$0xff]
  %v228 = vld [vmem:[%s1 + $0x4b8] sm:$0xff]
  %v229 = vld [vmem:[%s1 + $0x4c0] sm:$0xff]
  %v230 = vld [vmem:[%s1 + $0x4c8] sm:$0xff]
  %v231 = vld [vmem:[%s1 + $0x4d0] sm:$0xff]
  %v232 = vld [vmem:[%s1 + $0x4d8] sm:$0xff]
  %v233 = vld [vmem:[%s1 + $0x4e0] sm:$0xff]
  %v234 = vld [vmem:[%s1 + $0x4e8] sm:$0xff]
  %v235 = vld [vmem:[%s1 + $0x4f0] sm:$0xff]
  %v236 = vld [vmem:[%s1 + $0x4f8] sm:$0xff]
  %v237 = vld [vmem:[%s1 + $0x500] sm:$0xff]
  %v238 = vld [vmem:[%s1 + $0x508] sm:$0xff]
  %v239 = vld [vmem:[%s1 + $0x510] sm:$0xff]
  %v240 = vld [vmem:[%s1 + $0x518] sm:$0xff]
  %v241 = vld [vmem:[%s1 + $0x520] sm:$0xff]
  %v242 = vld [vmem:[%s1 + $0x528] sm:$0xff]
  %v243 = vld [vmem:[%s1 + $0x530] sm:$0xff]
  %v244 = vld [vmem:[%s1 + $0x538] sm:$0xff]
  %v245 = vld [vmem:[%s1 + $0x540] sm:$0xff]
  %v246 = vld [vmem:[%s1 + $0x548] sm:$0xff]
  %v247 = vld [vmem:[%s1 + $0x550] sm:$0xff]
  %v248 = vld [vmem:[%s1 + $0x558] sm:$0xff]
  %v249 = vld [vmem:[%s1 + $0x560] sm:$0xff]
  %v250 = vld [vmem:[%s1 + $0x568] sm:$0xff]
  %v251 = vld [vmem:[%s1 + $0x570] sm:$0xff]
  %v252 = vld [vmem:[%s1 + $0x578] sm:$0xff]
  %v253 = vld [vmem:[%s1 + $0x580] sm:$0xff]
  %v254 = vld [vmem:[%s1 + $0x588] sm:$0xff]
  %v255 = vld [vmem:[%s1 + $0x590] sm:$0xff]
  %v256 = vld [vmem:[%s1 + $0x598] sm:$0xff]
  %v257 = vld [vmem:[%s1 + $0x5a0] sm:$0xff]
  %v258 = vld [vmem:[%s1 + $0x5a8] sm:$0xff]
  %v259 = vld [vmem:[%s1 + $0x5b0] sm:$0xff]
  %v260 = vld [vmem:[%s1 + $0x5b8] sm:$0xff]
  %v261 = vld [vmem:[%s1 + $0x5c0] sm:$0xff]
  %v262 = vld [vmem:[%s1 + $0x5c8] sm:$0xff]
  %v263 = vld [vmem:[%s1 + $0x5d0] sm:$0xff]
  %v264 = vld [vmem:[%s1 + $0x5d8] sm:$0xff]
  %v265 = vld [vmem:[%s1 + $0x5e0] sm:$0xff]
  %v266 = vld [vmem:[%s1 + $0x5e8] sm:$0xff]
  %v267 = vld [vmem:[%s1 + $0x5f0] sm:$0xff]
  %v268 = vld [vmem:[%s1 + $0x5f8] sm:$0xff]
  %v269 = vld [vmem:[%s1 + $0x600] sm:$0xff]
  %v270 = vld [vmem:[%s1 + $0x608] sm:$0xff]
  %v271 = vld [vmem:[%s1 + $0x610] sm:$0xff]
  %v272 = vld [vmem:[%s1 + $0x618] sm:$0xff]
  %v273 = vld [vmem:[%s1 + $0x620] sm:$0xff]
  %v274 = vld [vmem:[%s1 + $0x628] sm:$0xff]
  %v275 = vld [vmem:[%s1 + $0x630] sm:$0xff]
  %v276 = vld [vmem:[%s1 + $0x638] sm:$0xff]
  %v277 = vld [vmem:[%s1 + $0x640] sm:$0xff]
  %v278 = vld [vmem:[%s1 + $0x648] sm:$0xff]
  %v279 = vld [vmem:[%s1 + $0x650] sm:$0xff]
  %v280 = vld [vmem:[%s1 + $0x658] sm:$0xff]
  %v281 = vld [vmem:[%s1 + $0x660] sm:$0xff]
  %v282 = vld [vmem:[%s1 + $0x668] sm:$0xff]
  %v283 = vld [vmem:[%s1 + $0x670] sm:$0xff]
  %v284 = vld [vmem:[%s1 + $0x678] sm:$0xff]
  %v285 = vld [vmem:[%s1 + $0x680] sm:$0xff]
  %v286 = vld [vmem:[%s1 + $0x688] sm:$0xff]
  %v287 = vld [vmem:[%s1 + $0x690] sm:$0xff]
  %v288 = vld [vmem:[%s1 + $0x698] sm:$0xff]
  %v289 = vld [vmem:[%s1 + $0x6a0] sm:$0xff]
  %v290 = vld [vmem:[%s1 + $0x6a8] sm:$0xff]
  %v291 = vld [vmem:[%s1 + $0x6b0] sm:$0xff]
  %v292 = vld [vmem:[%s1 + $0x6b8] sm:$0xff]
  %v293 = vld [vmem:[%s1 + $0x6c0] sm:$0xff]
  %v294 = vld [vmem:[%s1 + $0x6c8] sm:$0xff]
  %v295 = vld [vmem:[%s1 + $0x6d0] sm:$0xff]
  %v296 = vld [vmem:[%s1 + $0x6d8] sm:$0xff]
  %v297 = vld [vmem:[%s1 + $0x6e0] sm:$0xff]
  %v298 = vld [vmem:[%s1 + $0x6e8] sm:$0xff]
  %v299 = vld [vmem:[%s1 + $0x6f0] sm:$0xff]
  %v300 = vld [vmem:[%s1 + $0x6f8] sm:$0xff]
  %v301 = vld [vmem:[%s1 + $0x700] sm:$0xff]
  %v302 = vld [vmem:[%s1 + $0x708] sm:$0xff]
  %v303 = vld [vmem:[%s1 + $0x710] sm:$0xff]
  %v304 = vld [vmem:[%s1 + $0x718] sm:$0xff]
  %v305 = vld [vmem:[%s1 + $0x720] sm:$0xff]
  %v306 = vld [vmem:[%s1 + $0x728] sm:$0xff]
  %v307 = vld [vmem:[%s1 + $0x730] sm:$0xff]
  %v308 = vld [vmem:[%s1 + $0x738] sm:$0xff]
  %v309 = vld [vmem:[%s1 + $0x740] sm:$0xff]
  %v310 = vld [vmem:[%s1 + $0x748] sm:$0xff]
  %v311 = vld [vmem:[%s1 + $0x750] sm:$0xff]
  %v312 = vld [vmem:[%s1 + $0x758] sm:$0xff]
  %v313 = vld [vmem:[%s1 + $0x760] sm:$0xff]
  %v314 = vld [vmem:[%s1 + $0x768] sm:$0xff]
  %v315 = vld [vmem:[%s1 + $0x770] sm:$0xff]
  %v316 = vld [vmem:[%s1 + $0x778] sm:$0xff]
  %v317 = vld [vmem:[%s1 + $0x780] sm:$0xff]
  %v318 = vld [vmem:[%s1 + $0x788] sm:$0xff]
  %v319 = vld [vmem:[%s1 + $0x790] sm:$0xff]
  %v320 = vld [vmem:[%s1 + $0x798] sm:$0xff]
  %v321 = vld [vmem:[%s1 + $0x7a0] sm:$0xff]
  %v322 = vld [vmem:[%s1 + $0x7a8] sm:$0xff]
  %v323 = vld [vmem:[%s1 + $0x7b0] sm:$0xff]
  %v324 = vld [vmem:[%s1 + $0x7b8] sm:$0xff]
  %v325 = vld [vmem:[%s1 + $0x7c0] sm:$0xff]
  %v326 = vld [vmem:[%s1 + $0x7c8] sm:$0xff]
  %v327 = vld [vmem:[%s1 + $0x7d0] sm:$0xff]
  %v328 = vld [vmem:[%s1 + $0x7d8] sm:$0xff]
  %v329 = vld [vmem:[%s1 + $0x7e0] sm:$0xff]
  %v330 = vld [vmem:[%s1 + $0x7e8] sm:$0xff]
  %v331 = vld [vmem:[%s1 + $0x7f0] sm:$0xff]
  %v332 = vld [vmem:[%s1 + $0x7f8] sm:$0xff]
  %v333 = vld [vmem:[%s1 + $0x800] sm:$0x11]
  %v334 = vld [vmem:[%s1 + $0x808] sm:$0x11]
  %v335 = vunpack.c.l.bf16 %v333
  %v336 = vunpack.c.h.bf16 %v333
  %v337 = vunpack.c.l.bf16 %v334
  %v338 = vunpack.c.h.bf16 %v334
  %v339 = vlaneseq
  %v340 = vshrl.u32 %v339, 7
  %v341 = vsub.s32 0, %v340
  %v342 = vrot.slane %v335, %v341
  %v343 = vlaneseq
  %v344 = vshrl.u32 %v343, 7
  %v345 = vsub.s32 0, %v344
  %v346 = vrot.slane %v336, %v345
  %v347 = vlaneseq
  %v348 = vshrl.u32 %v347, 7
  %v349 = vsub.s32 0, %v348
  %v350 = vrot.slane %v337, %v349
  %v351 = vlaneseq
  %v352 = vshrl.u32 %v351, 7
  %v353 = vsub.s32 0, %v352
  %v354 = vrot.slane %v338, %v353
  %v611 = vunpack.c.l.b16 %v77
  %v612 = vunpack.c.h.b16 %v77
  %v613 = vunpack.c.l.b16 %v78
  %v614 = vunpack.c.h.b16 %v78
  %v615 = vunpack.c.l.b16 %v79
  %v616 = vunpack.c.h.b16 %v79
  %v617 = vunpack.c.l.b16 %v80
  %v618 = vunpack.c.h.b16 %v80
  %v619 = vunpack.c.l.b16 %v81
  %v620 = vunpack.c.h.b16 %v81
  %v621 = vunpack.c.l.b16 %v82
  %v622 = vunpack.c.h.b16 %v82
  %v623 = vunpack.c.l.b16 %v83
  %v624 = vunpack.c.h.b16 %v83
  %v625 = vunpack.c.l.b16 %v84
  %v626 = vunpack.c.h.b16 %v84
  %v627 = vunpack.c.l.b16 %v85
  %v628 = vunpack.c.h.b16 %v85
  %v629 = vunpack.c.l.b16 %v86
  %v630 = vunpack.c.h.b16 %v86
  %v631 = vunpack.c.l.b16 %v87
  %v632 = vunpack.c.h.b16 %v87
  %v633 = vunpack.c.l.b16 %v88
  %v634 = vunpack.c.h.b16 %v88
  %v635 = vunpack.c.l.b16 %v89
  %v636 = vunpack.c.h.b16 %v89
  %v637 = vunpack.c.l.b16 %v90
  %v638 = vunpack.c.h.b16 %v90
  %v639 = vunpack.c.l.b16 %v91
  %v640 = vunpack.c.h.b16 %v91
  %v641 = vunpack.c.l.b16 %v92
  %v642 = vunpack.c.h.b16 %v92
  %v643 = vunpack.c.l.b16 %v93
  %v644 = vunpack.c.h.b16 %v93
  %v645 = vunpack.c.l.b16 %v94
  %v646 = vunpack.c.h.b16 %v94
  %v647 = vunpack.c.l.b16 %v95
  %v648 = vunpack.c.h.b16 %v95
  %v649 = vunpack.c.l.b16 %v96
  %v650 = vunpack.c.h.b16 %v96
  %v651 = vunpack.c.l.b16 %v97
  %v652 = vunpack.c.h.b16 %v97
  %v653 = vunpack.c.l.b16 %v98
  %v654 = vunpack.c.h.b16 %v98
  %v655 = vunpack.c.l.b16 %v99
  %v656 = vunpack.c.h.b16 %v99
  %v657 = vunpack.c.l.b16 %v100
  %v658 = vunpack.c.h.b16 %v100
  %v659 = vunpack.c.l.b16 %v101
  %v660 = vunpack.c.h.b16 %v101
  %v661 = vunpack.c.l.b16 %v102
  %v662 = vunpack.c.h.b16 %v102
  %v663 = vunpack.c.l.b16 %v103
  %v664 = vunpack.c.h.b16 %v103
  %v665 = vunpack.c.l.b16 %v104
  %v666 = vunpack.c.h.b16 %v104
  %v667 = vunpack.c.l.b16 %v105
  %v668 = vunpack.c.h.b16 %v105
  %v669 = vunpack.c.l.b16 %v106
  %v670 = vunpack.c.h.b16 %v106
  %v671 = vunpack.c.l.b16 %v107
  %v672 = vunpack.c.h.b16 %v107
  %v673 = vunpack.c.l.b16 %v108
  %v674 = vunpack.c.h.b16 %v108
  %v675 = vunpack.c.l.b16 %v109
  %v676 = vunpack.c.h.b16 %v109
  %v677 = vunpack.c.l.b16 %v110
  %v678 = vunpack.c.h.b16 %v110
  %v679 = vunpack.c.l.b16 %v111
  %v680 = vunpack.c.h.b16 %v111
  %v681 = vunpack.c.l.b16 %v112
  %v682 = vunpack.c.h.b16 %v112
  %v683 = vunpack.c.l.b16 %v113
  %v684 = vunpack.c.h.b16 %v113
  %v685 = vunpack.c.l.b16 %v114
  %v686 = vunpack.c.h.b16 %v114
  %v687 = vunpack.c.l.b16 %v115
  %v688 = vunpack.c.h.b16 %v115
  %v689 = vunpack.c.l.b16 %v116
  %v690 = vunpack.c.h.b16 %v116
  %v691 = vunpack.c.l.b16 %v117
  %v692 = vunpack.c.h.b16 %v117
  %v693 = vunpack.c.l.b16 %v118
  %v694 = vunpack.c.h.b16 %v118
  %v695 = vunpack.c.l.b16 %v119
  %v696 = vunpack.c.h.b16 %v119
  %v697 = vunpack.c.l.b16 %v120
  %v698 = vunpack.c.h.b16 %v120
  %v699 = vunpack.c.l.b16 %v121
  %v700 = vunpack.c.h.b16 %v121
  %v701 = vunpack.c.l.b16 %v122
  %v702 = vunpack.c.h.b16 %v122
  %v703 = vunpack.c.l.b16 %v123
  %v704 = vunpack.c.h.b16 %v123
  %v705 = vunpack.c.l.b16 %v124
  %v706 = vunpack.c.h.b16 %v124
  %v707 = vunpack.c.l.b16 %v125
  %v708 = vunpack.c.h.b16 %v125
  %v709 = vunpack.c.l.b16 %v126
  %v710 = vunpack.c.h.b16 %v126
  %v711 = vunpack.c.l.b16 %v127
  %v712 = vunpack.c.h.b16 %v127
  %v713 = vunpack.c.l.b16 %v128
  %v714 = vunpack.c.h.b16 %v128
  %v715 = vunpack.c.l.b16 %v129
  %v716 = vunpack.c.h.b16 %v129
  %v717 = vunpack.c.l.b16 %v130
  %v718 = vunpack.c.h.b16 %v130
  %v719 = vunpack.c.l.b16 %v131
  %v720 = vunpack.c.h.b16 %v131
  %v721 = vunpack.c.l.b16 %v132
  %v722 = vunpack.c.h.b16 %v132
  %v723 = vunpack.c.l.b16 %v133
  %v724 = vunpack.c.h.b16 %v133
  %v725 = vunpack.c.l.b16 %v134
  %v726 = vunpack.c.h.b16 %v134
  %v727 = vunpack.c.l.b16 %v135
  %v728 = vunpack.c.h.b16 %v135
  %v729 = vunpack.c.l.b16 %v136
  %v730 = vunpack.c.h.b16 %v136
  %v731 = vunpack.c.l.b16 %v137
  %v732 = vunpack.c.h.b16 %v137
  %v733 = vunpack.c.l.b16 %v138
  %v734 = vunpack.c.h.b16 %v138
  %v735 = vunpack.c.l.b16 %v139
  %v736 = vunpack.c.h.b16 %v139
  %v737 = vunpack.c.l.b16 %v140
  %v738 = vunpack.c.h.b16 %v140
  %v739 = vunpack.c.l.b16 %v141
  %v740 = vunpack.c.h.b16 %v141
  %v741 = vunpack.c.l.b16 %v142
  %v742 = vunpack.c.h.b16 %v142
  %v743 = vunpack.c.l.b16 %v143
  %v744 = vunpack.c.h.b16 %v143
  %v745 = vunpack.c.l.b16 %v144
  %v746 = vunpack.c.h.b16 %v144
  %v747 = vunpack.c.l.b16 %v145
  %v748 = vunpack.c.h.b16 %v145
  %v749 = vunpack.c.l.b16 %v146
  %v750 = vunpack.c.h.b16 %v146
  %v751 = vunpack.c.l.b16 %v147
  %v752 = vunpack.c.h.b16 %v147
  %v753 = vunpack.c.l.b16 %v148
  %v754 = vunpack.c.h.b16 %v148
  %v755 = vunpack.c.l.b16 %v149
  %v756 = vunpack.c.h.b16 %v149
  %v757 = vunpack.c.l.b16 %v150
  %v758 = vunpack.c.h.b16 %v150
  %v759 = vunpack.c.l.b16 %v151
  %v760 = vunpack.c.h.b16 %v151
  %v761 = vunpack.c.l.b16 %v152
  %v762 = vunpack.c.h.b16 %v152
  %v763 = vunpack.c.l.b16 %v153
  %v764 = vunpack.c.h.b16 %v153
  %v765 = vunpack.c.l.b16 %v154
  %v766 = vunpack.c.h.b16 %v154
  %v767 = vunpack.c.l.b16 %v155
  %v768 = vunpack.c.h.b16 %v155
  %v769 = vunpack.c.l.b16 %v156
  %v770 = vunpack.c.h.b16 %v156
  %v771 = vunpack.c.l.b16 %v157
  %v772 = vunpack.c.h.b16 %v157
  %v773 = vunpack.c.l.b16 %v158
  %v774 = vunpack.c.h.b16 %v158
  %v775 = vunpack.c.l.b16 %v159
  %v776 = vunpack.c.h.b16 %v159
  %v777 = vunpack.c.l.b16 %v160
  %v778 = vunpack.c.h.b16 %v160
  %v779 = vunpack.c.l.b16 %v161
  %v780 = vunpack.c.h.b16 %v161
  %v781 = vunpack.c.l.b16 %v162
  %v782 = vunpack.c.h.b16 %v162
  %v783 = vunpack.c.l.b16 %v163
  %v784 = vunpack.c.h.b16 %v163
  %v785 = vunpack.c.l.b16 %v164
  %v786 = vunpack.c.h.b16 %v164
  %v787 = vunpack.c.l.b16 %v165
  %v788 = vunpack.c.h.b16 %v165
  %v789 = vunpack.c.l.b16 %v166
  %v790 = vunpack.c.h.b16 %v166
  %v791 = vunpack.c.l.b16 %v167
  %v792 = vunpack.c.h.b16 %v167
  %v793 = vunpack.c.l.b16 %v168
  %v794 = vunpack.c.h.b16 %v168
  %v795 = vunpack.c.l.b16 %v169
  %v796 = vunpack.c.h.b16 %v169
  %v797 = vunpack.c.l.b16 %v170
  %v798 = vunpack.c.h.b16 %v170
  %v799 = vunpack.c.l.b16 %v171
  %v800 = vunpack.c.h.b16 %v171
  %v801 = vunpack.c.l.b16 %v172
  %v802 = vunpack.c.h.b16 %v172
  %v803 = vunpack.c.l.b16 %v173
  %v804 = vunpack.c.h.b16 %v173
  %v805 = vunpack.c.l.b16 %v174
  %v806 = vunpack.c.h.b16 %v174
  %v807 = vunpack.c.l.b16 %v175
  %v808 = vunpack.c.h.b16 %v175
  %v809 = vunpack.c.l.b16 %v176
  %v810 = vunpack.c.h.b16 %v176
  %v811 = vunpack.c.l.b16 %v177
  %v812 = vunpack.c.h.b16 %v177
  %v813 = vunpack.c.l.b16 %v178
  %v814 = vunpack.c.h.b16 %v178
  %v815 = vunpack.c.l.b16 %v179
  %v816 = vunpack.c.h.b16 %v179
  %v817 = vunpack.c.l.b16 %v180
  %v818 = vunpack.c.h.b16 %v180
  %v819 = vunpack.c.l.b16 %v181
  %v820 = vunpack.c.h.b16 %v181
  %v821 = vunpack.c.l.b16 %v182
  %v822 = vunpack.c.h.b16 %v182
  %v823 = vunpack.c.l.b16 %v183
  %v824 = vunpack.c.h.b16 %v183
  %v825 = vunpack.c.l.b16 %v184
  %v826 = vunpack.c.h.b16 %v184
  %v827 = vunpack.c.l.b16 %v185
  %v828 = vunpack.c.h.b16 %v185
  %v829 = vunpack.c.l.b16 %v186
  %v830 = vunpack.c.h.b16 %v186
  %v831 = vunpack.c.l.b16 %v187
  %v832 = vunpack.c.h.b16 %v187
  %v833 = vunpack.c.l.b16 %v188
  %v834 = vunpack.c.h.b16 %v188
  %v835 = vunpack.c.l.b16 %v189
  %v836 = vunpack.c.h.b16 %v189
  %v837 = vunpack.c.l.b16 %v190
  %v838 = vunpack.c.h.b16 %v190
  %v839 = vunpack.c.l.b16 %v191
  %v840 = vunpack.c.h.b16 %v191
  %v841 = vunpack.c.l.b16 %v192
  %v842 = vunpack.c.h.b16 %v192
  %v843 = vunpack.c.l.b16 %v193
  %v844 = vunpack.c.h.b16 %v193
  %v845 = vunpack.c.l.b16 %v194
  %v846 = vunpack.c.h.b16 %v194
  %v847 = vunpack.c.l.b16 %v195
  %v848 = vunpack.c.h.b16 %v195
  %v849 = vunpack.c.l.b16 %v196
  %v850 = vunpack.c.h.b16 %v196
  %v851 = vunpack.c.l.b16 %v197
  %v852 = vunpack.c.h.b16 %v197
  %v853 = vunpack.c.l.b16 %v198
  %v854 = vunpack.c.h.b16 %v198
  %v855 = vunpack.c.l.b16 %v199
  %v856 = vunpack.c.h.b16 %v199
  %v857 = vunpack.c.l.b16 %v200
  %v858 = vunpack.c.h.b16 %v200
  %v859 = vunpack.c.l.b16 %v201
  %v860 = vunpack.c.h.b16 %v201
  %v861 = vunpack.c.l.b16 %v202
  %v862 = vunpack.c.h.b16 %v202
  %v863 = vunpack.c.l.b16 %v203
  %v864 = vunpack.c.h.b16 %v203
  %v865 = vunpack.c.l.b16 %v204
  %v866 = vunpack.c.h.b16 %v204
  %v867 = vunpack.c.l.b16 %v205
  %v868 = vunpack.c.h.b16 %v205
  %v869 = vunpack.c.l.b16 %v206
  %v870 = vunpack.c.h.b16 %v206
  %v871 = vunpack.c.l.b16 %v207
  %v872 = vunpack.c.h.b16 %v207
  %v873 = vunpack.c.l.b16 %v208
  %v874 = vunpack.c.h.b16 %v208
  %v875 = vunpack.c.l.b16 %v209
  %v876 = vunpack.c.h.b16 %v209
  %v877 = vunpack.c.l.b16 %v210
  %v878 = vunpack.c.h.b16 %v210
  %v879 = vunpack.c.l.b16 %v211
  %v880 = vunpack.c.h.b16 %v211
  %v881 = vunpack.c.l.b16 %v212
  %v882 = vunpack.c.h.b16 %v212
  %v883 = vunpack.c.l.b16 %v213
  %v884 = vunpack.c.h.b16 %v213
  %v885 = vunpack.c.l.b16 %v214
  %v886 = vunpack.c.h.b16 %v214
  %v887 = vunpack.c.l.b16 %v215
  %v888 = vunpack.c.h.b16 %v215
  %v889 = vunpack.c.l.b16 %v216
  %v890 = vunpack.c.h.b16 %v216
  %v891 = vunpack.c.l.b16 %v217
  %v892 = vunpack.c.h.b16 %v217
  %v893 = vunpack.c.l.b16 %v218
  %v894 = vunpack.c.h.b16 %v218
  %v895 = vunpack.c.l.b16 %v219
  %v896 = vunpack.c.h.b16 %v219
  %v897 = vunpack.c.l.b16 %v220
  %v898 = vunpack.c.h.b16 %v220
  %v899 = vunpack.c.l.b16 %v221
  %v900 = vunpack.c.h.b16 %v221
  %v901 = vunpack.c.l.b16 %v222
  %v902 = vunpack.c.h.b16 %v222
  %v903 = vunpack.c.l.b16 %v223
  %v904 = vunpack.c.h.b16 %v223
  %v905 = vunpack.c.l.b16 %v224
  %v906 = vunpack.c.h.b16 %v224
  %v907 = vunpack.c.l.b16 %v225
  %v908 = vunpack.c.h.b16 %v225
  %v909 = vunpack.c.l.b16 %v226
  %v910 = vunpack.c.h.b16 %v226
  %v911 = vunpack.c.l.b16 %v227
  %v912 = vunpack.c.h.b16 %v227
  %v913 = vunpack.c.l.b16 %v228
  %v914 = vunpack.c.h.b16 %v228
  %v915 = vunpack.c.l.b16 %v229
  %v916 = vunpack.c.h.b16 %v229
  %v917 = vunpack.c.l.b16 %v230
  %v918 = vunpack.c.h.b16 %v230
  %v919 = vunpack.c.l.b16 %v231
  %v920 = vunpack.c.h.b16 %v231
  %v921 = vunpack.c.l.b16 %v232
  %v922 = vunpack.c.h.b16 %v232
  %v923 = vunpack.c.l.b16 %v233
  %v924 = vunpack.c.h.b16 %v233
  %v925 = vunpack.c.l.b16 %v234
  %v926 = vunpack.c.h.b16 %v234
  %v927 = vunpack.c.l.b16 %v235
  %v928 = vunpack.c.h.b16 %v235
  %v929 = vunpack.c.l.b16 %v236
  %v930 = vunpack.c.h.b16 %v236
  %v931 = vunpack.c.l.b16 %v237
  %v932 = vunpack.c.h.b16 %v237
  %v933 = vunpack.c.l.b16 %v238
  %v934 = vunpack.c.h.b16 %v238
  %v935 = vunpack.c.l.b16 %v239
  %v936 = vunpack.c.h.b16 %v239
  %v937 = vunpack.c.l.b16 %v240
  %v938 = vunpack.c.h.b16 %v240
  %v939 = vunpack.c.l.b16 %v241
  %v940 = vunpack.c.h.b16 %v241
  %v941 = vunpack.c.l.b16 %v242
  %v942 = vunpack.c.h.b16 %v242
  %v943 = vunpack.c.l.b16 %v243
  %v944 = vunpack.c.h.b16 %v243
  %v945 = vunpack.c.l.b16 %v244
  %v946 = vunpack.c.h.b16 %v244
  %v947 = vunpack.c.l.b16 %v245
  %v948 = vunpack.c.h.b16 %v245
  %v949 = vunpack.c.l.b16 %v246
  %v950 = vunpack.c.h.b16 %v246
  %v951 = vunpack.c.l.b16 %v247
  %v952 = vunpack.c.h.b16 %v247
  %v953 = vunpack.c.l.b16 %v248
  %v954 = vunpack.c.h.b16 %v248
  %v955 = vunpack.c.l.b16 %v249
  %v956 = vunpack.c.h.b16 %v249
  %v957 = vunpack.c.l.b16 %v250
  %v958 = vunpack.c.h.b16 %v250
  %v959 = vunpack.c.l.b16 %v251
  %v960 = vunpack.c.h.b16 %v251
  %v961 = vunpack.c.l.b16 %v252
  %v962 = vunpack.c.h.b16 %v252
  %v963 = vunpack.c.l.b16 %v253
  %v964 = vunpack.c.h.b16 %v253
  %v965 = vunpack.c.l.b16 %v254
  %v966 = vunpack.c.h.b16 %v254
  %v967 = vunpack.c.l.b16 %v255
  %v968 = vunpack.c.h.b16 %v255
  %v969 = vunpack.c.l.b16 %v256
  %v970 = vunpack.c.h.b16 %v256
  %v971 = vunpack.c.l.b16 %v257
  %v972 = vunpack.c.h.b16 %v257
  %v973 = vunpack.c.l.b16 %v258
  %v974 = vunpack.c.h.b16 %v258
  %v975 = vunpack.c.l.b16 %v259
  %v976 = vunpack.c.h.b16 %v259
  %v977 = vunpack.c.l.b16 %v260
  %v978 = vunpack.c.h.b16 %v260
  %v979 = vunpack.c.l.b16 %v261
  %v980 = vunpack.c.h.b16 %v261
  %v981 = vunpack.c.l.b16 %v262
  %v982 = vunpack.c.h.b16 %v262
  %v983 = vunpack.c.l.b16 %v263
  %v984 = vunpack.c.h.b16 %v263
  %v985 = vunpack.c.l.b16 %v264
  %v986 = vunpack.c.h.b16 %v264
  %v987 = vunpack.c.l.b16 %v265
  %v988 = vunpack.c.h.b16 %v265
  %v989 = vunpack.c.l.b16 %v266
  %v990 = vunpack.c.h.b16 %v266
  %v991 = vunpack.c.l.b16 %v267
  %v992 = vunpack.c.h.b16 %v267
  %v993 = vunpack.c.l.b16 %v268
  %v994 = vunpack.c.h.b16 %v268
  %v995 = vunpack.c.l.b16 %v269
  %v996 = vunpack.c.h.b16 %v269
  %v997 = vunpack.c.l.b16 %v270
  %v998 = vunpack.c.h.b16 %v270
  %v999 = vunpack.c.l.b16 %v271
  %v1000 = vunpack.c.h.b16 %v271
  %v1001 = vunpack.c.l.b16 %v272
  %v1002 = vunpack.c.h.b16 %v272
  %v1003 = vunpack.c.l.b16 %v273
  %v1004 = vunpack.c.h.b16 %v273
  %v1005 = vunpack.c.l.b16 %v274
  %v1006 = vunpack.c.h.b16 %v274
  %v1007 = vunpack.c.l.b16 %v275
  %v1008 = vunpack.c.h.b16 %v275
  %v1009 = vunpack.c.l.b16 %v276
  %v1010 = vunpack.c.h.b16 %v276
  %v1011 = vunpack.c.l.b16 %v277
  %v1012 = vunpack.c.h.b16 %v277
  %v1013 = vunpack.c.l.b16 %v278
  %v1014 = vunpack.c.h.b16 %v278
  %v1015 = vunpack.c.l.b16 %v279
  %v1016 = vunpack.c.h.b16 %v279
  %v1017 = vunpack.c.l.b16 %v280
  %v1018 = vunpack.c.h.b16 %v280
  %v1019 = vunpack.c.l.b16 %v281
  %v1020 = vunpack.c.h.b16 %v281
  %v1021 = vunpack.c.l.b16 %v282
  %v1022 = vunpack.c.h.b16 %v282
  %v1023 = vunpack.c.l.b16 %v283
  %v1024 = vunpack.c.h.b16 %v283
  %v1025 = vunpack.c.l.b16 %v284
  %v1026 = vunpack.c.h.b16 %v284
  %v1027 = vunpack.c.l.b16 %v285
  %v1028 = vunpack.c.h.b16 %v285
  %v1029 = vunpack.c.l.b16 %v286
  %v1030 = vunpack.c.h.b16 %v286
  %v1031 = vunpack.c.l.b16 %v287
  %v1032 = vunpack.c.h.b16 %v287
  %v1033 = vunpack.c.l.b16 %v288
  %v1034 = vunpack.c.h.b16 %v288
  %v1035 = vunpack.c.l.b16 %v289
  %v1036 = vunpack.c.h.b16 %v289
  %v1037 = vunpack.c.l.b16 %v290
  %v1038 = vunpack.c.h.b16 %v290
  %v1039 = vunpack.c.l.b16 %v291
  %v1040 = vunpack.c.h.b16 %v291
  %v1041 = vunpack.c.l.b16 %v292
  %v1042 = vunpack.c.h.b16 %v292
  %v1043 = vunpack.c.l.b16 %v293
  %v1044 = vunpack.c.h.b16 %v293
  %v1045 = vunpack.c.l.b16 %v294
  %v1046 = vunpack.c.h.b16 %v294
  %v1047 = vunpack.c.l.b16 %v295
  %v1048 = vunpack.c.h.b16 %v295
  %v1049 = vunpack.c.l.b16 %v296
  %v1050 = vunpack.c.h.b16 %v296
  %v1051 = vunpack.c.l.b16 %v297
  %v1052 = vunpack.c.h.b16 %v297
  %v1053 = vunpack.c.l.b16 %v298
  %v1054 = vunpack.c.h.b16 %v298
  %v1055 = vunpack.c.l.b16 %v299
  %v1056 = vunpack.c.h.b16 %v299
  %v1057 = vunpack.c.l.b16 %v300
  %v1058 = vunpack.c.h.b16 %v300
  %v1059 = vunpack.c.l.b16 %v301
  %v1060 = vunpack.c.h.b16 %v301
  %v1061 = vunpack.c.l.b16 %v302
  %v1062 = vunpack.c.h.b16 %v302
  %v1063 = vunpack.c.l.b16 %v303
  %v1064 = vunpack.c.h.b16 %v303
  %v1065 = vunpack.c.l.b16 %v304
  %v1066 = vunpack.c.h.b16 %v304
  %v1067 = vunpack.c.l.b16 %v305
  %v1068 = vunpack.c.h.b16 %v305
  %v1069 = vunpack.c.l.b16 %v306
  %v1070 = vunpack.c.h.b16 %v306
  %v1071 = vunpack.c.l.b16 %v307
  %v1072 = vunpack.c.h.b16 %v307
  %v1073 = vunpack.c.l.b16 %v308
  %v1074 = vunpack.c.h.b16 %v308
  %v1075 = vunpack.c.l.b16 %v309
  %v1076 = vunpack.c.h.b16 %v309
  %v1077 = vunpack.c.l.b16 %v310
  %v1078 = vunpack.c.h.b16 %v310
  %v1079 = vunpack.c.l.b16 %v311
  %v1080 = vunpack.c.h.b16 %v311
  %v1081 = vunpack.c.l.b16 %v312
  %v1082 = vunpack.c.h.b16 %v312
  %v1083 = vunpack.c.l.b16 %v313
  %v1084 = vunpack.c.h.b16 %v313
  %v1085 = vunpack.c.l.b16 %v314
  %v1086 = vunpack.c.h.b16 %v314
  %v1087 = vunpack.c.l.b16 %v315
  %v1088 = vunpack.c.h.b16 %v315
  %v1089 = vunpack.c.l.b16 %v316
  %v1090 = vunpack.c.h.b16 %v316
  %v1091 = vunpack.c.l.b16 %v317
  %v1092 = vunpack.c.h.b16 %v317
  %v1093 = vunpack.c.l.b16 %v318
  %v1094 = vunpack.c.h.b16 %v318
  %v1095 = vunpack.c.l.b16 %v319
  %v1096 = vunpack.c.h.b16 %v319
  %v1097 = vunpack.c.l.b16 %v320
  %v1098 = vunpack.c.h.b16 %v320
  %v1099 = vunpack.c.l.b16 %v321
  %v1100 = vunpack.c.h.b16 %v321
  %v1101 = vunpack.c.l.b16 %v322
  %v1102 = vunpack.c.h.b16 %v322
  %v1103 = vunpack.c.l.b16 %v323
  %v1104 = vunpack.c.h.b16 %v323
  %v1105 = vunpack.c.l.b16 %v324
  %v1106 = vunpack.c.h.b16 %v324
  %v1107 = vunpack.c.l.b16 %v325
  %v1108 = vunpack.c.h.b16 %v325
  %v1109 = vunpack.c.l.b16 %v326
  %v1110 = vunpack.c.h.b16 %v326
  %v1111 = vunpack.c.l.b16 %v327
  %v1112 = vunpack.c.h.b16 %v327
  %v1113 = vunpack.c.l.b16 %v328
  %v1114 = vunpack.c.h.b16 %v328
  %v1115 = vunpack.c.l.b16 %v329
  %v1116 = vunpack.c.h.b16 %v329
  %v1117 = vunpack.c.l.b16 %v330
  %v1118 = vunpack.c.h.b16 %v330
  %v1119 = vunpack.c.l.b16 %v331
  %v1120 = vunpack.c.h.b16 %v331
  %v1121 = vunpack.c.l.b16 %v332
  %v1122 = vunpack.c.h.b16 %v332
  %v1123 = vpack.c.b16 %v615, %v611
  %v1124 = vpack.c.b16 %v616, %v612
  %v1125 = vpack.c.b16 %v617, %v613
  %v1126 = vpack.c.b16 %v618, %v614
  %v1127 = vpack.c.b16 %v623, %v619
  %v1128 = vpack.c.b16 %v624, %v620
  %v1129 = vpack.c.b16 %v625, %v621
  %v1130 = vpack.c.b16 %v626, %v622
  %v1131 = vpack.c.b16 %v631, %v627
  %v1132 = vpack.c.b16 %v632, %v628
  %v1133 = vpack.c.b16 %v633, %v629
  %v1134 = vpack.c.b16 %v634, %v630
  %v1135 = vpack.c.b16 %v639, %v635
  %v1136 = vpack.c.b16 %v640, %v636
  %v1137 = vpack.c.b16 %v641, %v637
  %v1138 = vpack.c.b16 %v642, %v638
  %v1139 = vpack.c.b16 %v647, %v643
  %v1140 = vpack.c.b16 %v648, %v644
  %v1141 = vpack.c.b16 %v649, %v645
  %v1142 = vpack.c.b16 %v650, %v646
  %v1143 = vpack.c.b16 %v655, %v651
  %v1144 = vpack.c.b16 %v656, %v652
  %v1145 = vpack.c.b16 %v657, %v653
  %v1146 = vpack.c.b16 %v658, %v654
  %v1147 = vpack.c.b16 %v663, %v659
  %v1148 = vpack.c.b16 %v664, %v660
  %v1149 = vpack.c.b16 %v665, %v661
  %v1150 = vpack.c.b16 %v666, %v662
  %v1151 = vpack.c.b16 %v671, %v667
  %v1152 = vpack.c.b16 %v672, %v668
  %v1153 = vpack.c.b16 %v673, %v669
  %v1154 = vpack.c.b16 %v674, %v670
  %v1155 = vpack.c.b16 %v679, %v675
  %v1156 = vpack.c.b16 %v680, %v676
  %v1157 = vpack.c.b16 %v681, %v677
  %v1158 = vpack.c.b16 %v682, %v678
  %v1159 = vpack.c.b16 %v687, %v683
  %v1160 = vpack.c.b16 %v688, %v684
  %v1161 = vpack.c.b16 %v689, %v685
  %v1162 = vpack.c.b16 %v690, %v686
  %v1163 = vpack.c.b16 %v695, %v691
  %v1164 = vpack.c.b16 %v696, %v692
  %v1165 = vpack.c.b16 %v697, %v693
  %v1166 = vpack.c.b16 %v698, %v694
  %v1167 = vpack.c.b16 %v703, %v699
  %v1168 = vpack.c.b16 %v704, %v700
  %v1169 = vpack.c.b16 %v705, %v701
  %v1170 = vpack.c.b16 %v706, %v702
  %v1171 = vpack.c.b16 %v711, %v707
  %v1172 = vpack.c.b16 %v712, %v708
  %v1173 = vpack.c.b16 %v713, %v709
  %v1174 = vpack.c.b16 %v714, %v710
  %v1175 = vpack.c.b16 %v719, %v715
  %v1176 = vpack.c.b16 %v720, %v716
  %v1177 = vpack.c.b16 %v721, %v717
  %v1178 = vpack.c.b16 %v722, %v718
  %v1179 = vpack.c.b16 %v727, %v723
  %v1180 = vpack.c.b16 %v728, %v724
  %v1181 = vpack.c.b16 %v729, %v725
  %v1182 = vpack.c.b16 %v730, %v726
  %v1183 = vpack.c.b16 %v735, %v731
  %v1184 = vpack.c.b16 %v736, %v732
  %v1185 = vpack.c.b16 %v737, %v733
  %v1186 = vpack.c.b16 %v738, %v734
  %v1187 = vpack.c.b16 %v743, %v739
  %v1188 = vpack.c.b16 %v744, %v740
  %v1189 = vpack.c.b16 %v745, %v741
  %v1190 = vpack.c.b16 %v746, %v742
  %v1191 = vpack.c.b16 %v751, %v747
  %v1192 = vpack.c.b16 %v752, %v748
  %v1193 = vpack.c.b16 %v753, %v749
  %v1194 = vpack.c.b16 %v754, %v750
  %v1195 = vpack.c.b16 %v759, %v755
  %v1196 = vpack.c.b16 %v760, %v756
  %v1197 = vpack.c.b16 %v761, %v757
  %v1198 = vpack.c.b16 %v762, %v758
  %v1199 = vpack.c.b16 %v767, %v763
  %v1200 = vpack.c.b16 %v768, %v764
  %v1201 = vpack.c.b16 %v769, %v765
  %v1202 = vpack.c.b16 %v770, %v766
  %v1203 = vpack.c.b16 %v775, %v771
  %v1204 = vpack.c.b16 %v776, %v772
  %v1205 = vpack.c.b16 %v777, %v773
  %v1206 = vpack.c.b16 %v778, %v774
  %v1207 = vpack.c.b16 %v783, %v779
  %v1208 = vpack.c.b16 %v784, %v780
  %v1209 = vpack.c.b16 %v785, %v781
  %v1210 = vpack.c.b16 %v786, %v782
  %v1211 = vpack.c.b16 %v791, %v787
  %v1212 = vpack.c.b16 %v792, %v788
  %v1213 = vpack.c.b16 %v793, %v789
  %v1214 = vpack.c.b16 %v794, %v790
  %v1215 = vpack.c.b16 %v799, %v795
  %v1216 = vpack.c.b16 %v800, %v796
  %v1217 = vpack.c.b16 %v801, %v797
  %v1218 = vpack.c.b16 %v802, %v798
  %v1219 = vpack.c.b16 %v807, %v803
  %v1220 = vpack.c.b16 %v808, %v804
  %v1221 = vpack.c.b16 %v809, %v805
  %v1222 = vpack.c.b16 %v810, %v806
  %v1223 = vpack.c.b16 %v815, %v811
  %v1224 = vpack.c.b16 %v816, %v812
  %v1225 = vpack.c.b16 %v817, %v813
  %v1226 = vpack.c.b16 %v818, %v814
  %v1227 = vpack.c.b16 %v823, %v819
  %v1228 = vpack.c.b16 %v824, %v820
  %v1229 = vpack.c.b16 %v825, %v821
  %v1230 = vpack.c.b16 %v826, %v822
  %v1231 = vpack.c.b16 %v831, %v827
  %v1232 = vpack.c.b16 %v832, %v828
  %v1233 = vpack.c.b16 %v833, %v829
  %v1234 = vpack.c.b16 %v834, %v830
  %v1235 = vpack.c.b16 %v839, %v835
  %v1236 = vpack.c.b16 %v840, %v836
  %v1237 = vpack.c.b16 %v841, %v837
  %v1238 = vpack.c.b16 %v842, %v838
  %v1239 = vpack.c.b16 %v847, %v843
  %v1240 = vpack.c.b16 %v848, %v844
  %v1241 = vpack.c.b16 %v849, %v845
  %v1242 = vpack.c.b16 %v850, %v846
  %v1243 = vpack.c.b16 %v855, %v851
  %v1244 = vpack.c.b16 %v856, %v852
  %v1245 = vpack.c.b16 %v857, %v853
  %v1246 = vpack.c.b16 %v858, %v854
  %v1247 = vpack.c.b16 %v863, %v859
  %v1248 = vpack.c.b16 %v864, %v860
  %v1249 = vpack.c.b16 %v865, %v861
  %v1250 = vpack.c.b16 %v866, %v862
  %v1251 = vpack.c.b16 %v871, %v867
  %v1252 = vpack.c.b16 %v872, %v868
  %v1253 = vpack.c.b16 %v873, %v869
  %v1254 = vpack.c.b16 %v874, %v870
  %v1255 = vpack.c.b16 %v879, %v875
  %v1256 = vpack.c.b16 %v880, %v876
  %v1257 = vpack.c.b16 %v881, %v877
  %v1258 = vpack.c.b16 %v882, %v878
  %v1259 = vpack.c.b16 %v887, %v883
  %v1260 = vpack.c.b16 %v888, %v884
  %v1261 = vpack.c.b16 %v889, %v885
  %v1262 = vpack.c.b16 %v890, %v886
  %v1263 = vpack.c.b16 %v895, %v891
  %v1264 = vpack.c.b16 %v896, %v892
  %v1265 = vpack.c.b16 %v897, %v893
  %v1266 = vpack.c.b16 %v898, %v894
  %v1267 = vpack.c.b16 %v903, %v899
  %v1268 = vpack.c.b16 %v904, %v900
  %v1269 = vpack.c.b16 %v905, %v901
  %v1270 = vpack.c.b16 %v906, %v902
  %v1271 = vpack.c.b16 %v911, %v907
  %v1272 = vpack.c.b16 %v912, %v908
  %v1273 = vpack.c.b16 %v913, %v909
  %v1274 = vpack.c.b16 %v914, %v910
  %v1275 = vpack.c.b16 %v919, %v915
  %v1276 = vpack.c.b16 %v920, %v916
  %v1277 = vpack.c.b16 %v921, %v917
  %v1278 = vpack.c.b16 %v922, %v918
  %v1279 = vpack.c.b16 %v927, %v923
  %v1280 = vpack.c.b16 %v928, %v924
  %v1281 = vpack.c.b16 %v929, %v925
  %v1282 = vpack.c.b16 %v930, %v926
  %v1283 = vpack.c.b16 %v935, %v931
  %v1284 = vpack.c.b16 %v936, %v932
  %v1285 = vpack.c.b16 %v937, %v933
  %v1286 = vpack.c.b16 %v938, %v934
  %v1287 = vpack.c.b16 %v943, %v939
  %v1288 = vpack.c.b16 %v944, %v940
  %v1289 = vpack.c.b16 %v945, %v941
  %v1290 = vpack.c.b16 %v946, %v942
  %v1291 = vpack.c.b16 %v951, %v947
  %v1292 = vpack.c.b16 %v952, %v948
  %v1293 = vpack.c.b16 %v953, %v949
  %v1294 = vpack.c.b16 %v954, %v950
  %v1295 = vpack.c.b16 %v959, %v955
  %v1296 = vpack.c.b16 %v960, %v956
  %v1297 = vpack.c.b16 %v961, %v957
  %v1298 = vpack.c.b16 %v962, %v958
  %v1299 = vpack.c.b16 %v967, %v963
  %v1300 = vpack.c.b16 %v968, %v964
  %v1301 = vpack.c.b16 %v969, %v965
  %v1302 = vpack.c.b16 %v970, %v966
  %v1303 = vpack.c.b16 %v975, %v971
  %v1304 = vpack.c.b16 %v976, %v972
  %v1305 = vpack.c.b16 %v977, %v973
  %v1306 = vpack.c.b16 %v978, %v974
  %v1307 = vpack.c.b16 %v983, %v979
  %v1308 = vpack.c.b16 %v984, %v980
  %v1309 = vpack.c.b16 %v985, %v981
  %v1310 = vpack.c.b16 %v986, %v982
  %v1311 = vpack.c.b16 %v991, %v987
  %v1312 = vpack.c.b16 %v992, %v988
  %v1313 = vpack.c.b16 %v993, %v989
  %v1314 = vpack.c.b16 %v994, %v990
  %v1315 = vpack.c.b16 %v999, %v995
  %v1316 = vpack.c.b16 %v1000, %v996
  %v1317 = vpack.c.b16 %v1001, %v997
  %v1318 = vpack.c.b16 %v1002, %v998
  %v1319 = vpack.c.b16 %v1007, %v1003
  %v1320 = vpack.c.b16 %v1008, %v1004
  %v1321 = vpack.c.b16 %v1009, %v1005
  %v1322 = vpack.c.b16 %v1010, %v1006
  %v1323 = vpack.c.b16 %v1015, %v1011
  %v1324 = vpack.c.b16 %v1016, %v1012
  %v1325 = vpack.c.b16 %v1017, %v1013
  %v1326 = vpack.c.b16 %v1018, %v1014
  %v1327 = vpack.c.b16 %v1023, %v1019
  %v1328 = vpack.c.b16 %v1024, %v1020
  %v1329 = vpack.c.b16 %v1025, %v1021
  %v1330 = vpack.c.b16 %v1026, %v1022
  %v1331 = vpack.c.b16 %v1031, %v1027
  %v1332 = vpack.c.b16 %v1032, %v1028
  %v1333 = vpack.c.b16 %v1033, %v1029
  %v1334 = vpack.c.b16 %v1034, %v1030
  %v1335 = vpack.c.b16 %v1039, %v1035
  %v1336 = vpack.c.b16 %v1040, %v1036
  %v1337 = vpack.c.b16 %v1041, %v1037
  %v1338 = vpack.c.b16 %v1042, %v1038
  %v1339 = vpack.c.b16 %v1047, %v1043
  %v1340 = vpack.c.b16 %v1048, %v1044
  %v1341 = vpack.c.b16 %v1049, %v1045
  %v1342 = vpack.c.b16 %v1050, %v1046
  %v1343 = vpack.c.b16 %v1055, %v1051
  %v1344 = vpack.c.b16 %v1056, %v1052
  %v1345 = vpack.c.b16 %v1057, %v1053
  %v1346 = vpack.c.b16 %v1058, %v1054
  %v1347 = vpack.c.b16 %v1063, %v1059
  %v1348 = vpack.c.b16 %v1064, %v1060
  %v1349 = vpack.c.b16 %v1065, %v1061
  %v1350 = vpack.c.b16 %v1066, %v1062
  %v1351 = vpack.c.b16 %v1071, %v1067
  %v1352 = vpack.c.b16 %v1072, %v1068
  %v1353 = vpack.c.b16 %v1073, %v1069
  %v1354 = vpack.c.b16 %v1074, %v1070
  %v1355 = vpack.c.b16 %v1079, %v1075
  %v1356 = vpack.c.b16 %v1080, %v1076
  %v1357 = vpack.c.b16 %v1081, %v1077
  %v1358 = vpack.c.b16 %v1082, %v1078
  %v1359 = vpack.c.b16 %v1087, %v1083
  %v1360 = vpack.c.b16 %v1088, %v1084
  %v1361 = vpack.c.b16 %v1089, %v1085
  %v1362 = vpack.c.b16 %v1090, %v1086
  %v1363 = vpack.c.b16 %v1095, %v1091
  %v1364 = vpack.c.b16 %v1096, %v1092
  %v1365 = vpack.c.b16 %v1097, %v1093
  %v1366 = vpack.c.b16 %v1098, %v1094
  %v1367 = vpack.c.b16 %v1103, %v1099
  %v1368 = vpack.c.b16 %v1104, %v1100
  %v1369 = vpack.c.b16 %v1105, %v1101
  %v1370 = vpack.c.b16 %v1106, %v1102
  %v1371 = vpack.c.b16 %v1111, %v1107
  %v1372 = vpack.c.b16 %v1112, %v1108
  %v1373 = vpack.c.b16 %v1113, %v1109
  %v1374 = vpack.c.b16 %v1114, %v1110
  %v1375 = vpack.c.b16 %v1119, %v1115
  %v1376 = vpack.c.b16 %v1120, %v1116
  %v1377 = vpack.c.b16 %v1121, %v1117
  %v1378 = vpack.c.b16 %v1122, %v1118
  %1635 = vmatprep.subr.bf16.mxu0 %v1124
  %1636 = vmatpush1.bf16.msra.mxu0 %v1123
  %1637 = vmatprep.subr.bf16.mxu0 %v1128
  %1638 = vmatpush1.bf16.msra.mxu0 %v1127
  %1639 = vmatprep.subr.bf16.mxu0 %v1132
  %1640 = vmatpush1.bf16.msra.mxu0 %v1131
  %1641 = vmatprep.subr.bf16.mxu0 %v1136
  %1642 = vmatpush1.bf16.msra.mxu0 %v1135
  %1643 = vmatprep.subr.bf16.mxu0 %v1140
  %1644 = vmatpush1.bf16.msra.mxu0 %v1139
  %1645 = vmatprep.subr.bf16.mxu0 %v1144
  %1646 = vmatpush1.bf16.msra.mxu0 %v1143
  %1647 = vmatprep.subr.bf16.mxu0 %v1148
  %1648 = vmatpush1.bf16.msra.mxu0 %v1147
  %1649 = vmatprep.subr.bf16.mxu0 %v1152
  %1650 = vmatpush1.bf16.msra.mxu0 %v1151
  %1651 = vmatprep.subr.bf16.mxu0 %v1156
  %1652 = vmatpush1.bf16.msra.mxu0 %v1155
  %1653 = vmatprep.subr.bf16.mxu0 %v1160
  %1654 = vmatpush1.bf16.msra.mxu0 %v1159
  %1655 = vmatprep.subr.bf16.mxu0 %v1164
  %1656 = vmatpush1.bf16.msra.mxu0 %v1163
  %1657 = vmatprep.subr.bf16.mxu0 %v1168
  %1658 = vmatpush1.bf16.msra.mxu0 %v1167
  %1659 = vmatprep.subr.bf16.mxu0 %v1172
  %1660 = vmatpush1.bf16.msra.mxu0 %v1171
  %1661 = vmatprep.subr.bf16.mxu0 %v1176
  %1662 = vmatpush1.bf16.msra.mxu0 %v1175
  %1663 = vmatprep.subr.bf16.mxu0 %v1180
  %1664 = vmatpush1.bf16.msra.mxu0 %v1179
  %1665 = vmatprep.subr.bf16.mxu0 %v1184
  %1666 = vmatpush1.bf16.msra.mxu0 %v1183
  %1667 = vmatprep.mubr.bf16.mxu0 %v70
  %1668 = vmatmul.mubr.bf16.gmra.mrb[0].mxu0 %v69
  %v1669 = vpop.f32.mrb[0].mxu0
  %v1670 = vadd.f32 %v342, %v1669
  %v1671 = vpop.f32.mrb[0].mxu0
  %v1672 = vadd.f32 %v346, %v1671
  %v1673 = vpop.f32.mrb[0].mxu0
  %v1674 = vpop.f32.mrb[0].mxu0
  %1675 = vdwg.mxu0
  %1676 = vmatprep.subr.bf16.mxu0 %v1188
  %1677 = vmatpush1.bf16.msra.mxu0 %v1187
  %1678 = vmatprep.subr.bf16.mxu0 %v1192
  %1679 = vmatpush1.bf16.msra.mxu0 %v1191
  %1680 = vmatprep.subr.bf16.mxu0 %v1196
  %1681 = vmatpush1.bf16.msra.mxu0 %v1195
  %1682 = vmatprep.subr.bf16.mxu0 %v1200
  %1683 = vmatpush1.bf16.msra.mxu0 %v1199
  %1684 = vmatprep.subr.bf16.mxu0 %v1204
  %1685 = vmatpush1.bf16.msra.mxu0 %v1203
  %1686 = vmatprep.subr.bf16.mxu0 %v1208
  %1687 = vmatpush1.bf16.msra.mxu0 %v1207
  %1688 = vmatprep.subr.bf16.mxu0 %v1212
  %1689 = vmatpush1.bf16.msra.mxu0 %v1211
  %1690 = vmatprep.subr.bf16.mxu0 %v1216
  %1691 = vmatpush1.bf16.msra.mxu0 %v1215
  %1692 = vmatprep.subr.bf16.mxu0 %v1220
  %1693 = vmatpush1.bf16.msra.mxu0 %v1219
  %1694 = vmatprep.subr.bf16.mxu0 %v1224
  %1695 = vmatpush1.bf16.msra.mxu0 %v1223
  %1696 = vmatprep.subr.bf16.mxu0 %v1228
  %1697 = vmatpush1.bf16.msra.mxu0 %v1227
  %1698 = vmatprep.subr.bf16.mxu0 %v1232
  %1699 = vmatpush1.bf16.msra.mxu0 %v1231
  %1700 = vmatprep.subr.bf16.mxu0 %v1236
  %1701 = vmatpush1.bf16.msra.mxu0 %v1235
  %1702 = vmatprep.subr.bf16.mxu0 %v1240
  %1703 = vmatpush1.bf16.msra.mxu0 %v1239
  %1704 = vmatprep.subr.bf16.mxu0 %v1244
  %1705 = vmatpush1.bf16.msra.mxu0 %v1243
  %1706 = vmatprep.subr.bf16.mxu0 %v1248
  %1707 = vmatpush1.bf16.msra.mxu0 %v1247
  %1708 = vmatprep.mubr.bf16.mxu0 %v72
  %1709 = vmatmul.mubr.bf16.gmra.mrb[0].mxu0 %v71
  %v1710 = vpop.f32.mrb[0].mxu0
  %v1711 = vadd.f32 %v1670, %v1710
  %v1712 = vpop.f32.mrb[0].mxu0
  %v1713 = vadd.f32 %v1672, %v1712
  %v1714 = vpop.f32.mrb[0].mxu0
  %v1715 = vpop.f32.mrb[0].mxu0
  %1716 = vdwg.mxu0
  %1717 = vmatprep.subr.bf16.mxu0 %v1252
  %1718 = vmatpush1.bf16.msra.mxu0 %v1251
  %1719 = vmatprep.subr.bf16.mxu0 %v1256
  %1720 = vmatpush1.bf16.msra.mxu0 %v1255
  %1721 = vmatprep.subr.bf16.mxu0 %v1260
  %1722 = vmatpush1.bf16.msra.mxu0 %v1259
  %1723 = vmatprep.subr.bf16.mxu0 %v1264
  %1724 = vmatpush1.bf16.msra.mxu0 %v1263
  %1725 = vmatprep.subr.bf16.mxu0 %v1268
  %1726 = vmatpush1.bf16.msra.mxu0 %v1267
  %1727 = vmatprep.subr.bf16.mxu0 %v1272
  %1728 = vmatpush1.bf16.msra.mxu0 %v1271
  %1729 = vmatprep.subr.bf16.mxu0 %v1276
  %1730 = vmatpush1.bf16.msra.mxu0 %v1275
  %1731 = vmatprep.subr.bf16.mxu0 %v1280
  %1732 = vmatpush1.bf16.msra.mxu0 %v1279
  %1733 = vmatprep.subr.bf16.mxu0 %v1284
  %1734 = vmatpush1.bf16.msra.mxu0 %v1283
  %1735 = vmatprep.subr.bf16.mxu0 %v1288
  %1736 = vmatpush1.bf16.msra.mxu0 %v1287
  %1737 = vmatprep.subr.bf16.mxu0 %v1292
  %1738 = vmatpush1.bf16.msra.mxu0 %v1291
  %1739 = vmatprep.subr.bf16.mxu0 %v1296
  %1740 = vmatpush1.bf16.msra.mxu0 %v1295
  %1741 = vmatprep.subr.bf16.mxu0 %v1300
  %1742 = vmatpush1.bf16.msra.mxu0 %v1299
  %1743 = vmatprep.subr.bf16.mxu0 %v1304
  %1744 = vmatpush1.bf16.msra.mxu0 %v1303
  %1745 = vmatprep.subr.bf16.mxu0 %v1308
  %1746 = vmatpush1.bf16.msra.mxu0 %v1307
  %1747 = vmatprep.subr.bf16.mxu0 %v1312
  %1748 = vmatpush1.bf16.msra.mxu0 %v1311
  %1749 = vmatprep.mubr.bf16.mxu0 %v74
  %1750 = vmatmul.mubr.bf16.gmra.mrb[0].mxu0 %v73
  %v1751 = vpop.f32.mrb[0].mxu0
  %v1752 = vadd.f32 %v1711, %v1751
  %v1753 = vpop.f32.mrb[0].mxu0
  %v1754 = vadd.f32 %v1713, %v1753
  %v1755 = vpop.f32.mrb[0].mxu0
  %v1756 = vpop.f32.mrb[0].mxu0
  %1757 = vdwg.mxu0
  %1758 = vmatprep.subr.bf16.mxu0 %v1316
  %1759 = vmatpush1.bf16.msra.mxu0 %v1315
  %1760 = vmatprep.subr.bf16.mxu0 %v1320
  %1761 = vmatpush1.bf16.msra.mxu0 %v1319
  %1762 = vmatprep.subr.bf16.mxu0 %v1324
  %1763 = vmatpush1.bf16.msra.mxu0 %v1323
  %1764 = vmatprep.subr.bf16.mxu0 %v1328
  %1765 = vmatpush1.bf16.msra.mxu0 %v1327
  %1766 = vmatprep.subr.bf16.mxu0 %v1332
  %1767 = vmatpush1.bf16.msra.mxu0 %v1331
  %1768 = vmatprep.subr.bf16.mxu0 %v1336
  %1769 = vmatpush1.bf16.msra.mxu0 %v1335
  %1770 = vmatprep.subr.bf16.mxu0 %v1340
  %1771 = vmatpush1.bf16.msra.mxu0 %v1339
  %1772 = vmatprep.subr.bf16.mxu0 %v1344
  %1773 = vmatpush1.bf16.msra.mxu0 %v1343
  %1774 = vmatprep.subr.bf16.mxu0 %v1348
  %1775 = vmatpush1.bf16.msra.mxu0 %v1347
  %1776 = vmatprep.subr.bf16.mxu0 %v1352
  %1777 = vmatpush1.bf16.msra.mxu0 %v1351
  %1778 = vmatprep.subr.bf16.mxu0 %v1356
  %1779 = vmatpush1.bf16.msra.mxu0 %v1355
  %1780 = vmatprep.subr.bf16.mxu0 %v1360
  %1781 = vmatpush1.bf16.msra.mxu0 %v1359
  %1782 = vmatprep.subr.bf16.mxu0 %v1364
  %1783 = vmatpush1.bf16.msra.mxu0 %v1363
  %1784 = vmatprep.subr.bf16.mxu0 %v1368
  %1785 = vmatpush1.bf16.msra.mxu0 %v1367
  %1786 = vmatprep.subr.bf16.mxu0 %v1372
  %1787 = vmatpush1.bf16.msra.mxu0 %v1371
  %1788 = vmatprep.subr.bf16.mxu0 %v1376
  %1789 = vmatpush1.bf16.msra.mxu0 %v1375
  %1790 = vmatprep.mubr.bf16.mxu0 %v76
  %1791 = vmatmul.mubr.bf16.gmra.mrb[0].mxu0 %v75
  %v1792 = vpop.f32.mrb[0].mxu0
  %v1793 = vadd.f32 %v1752, %v1792
  %v1794 = vpop.f32.mrb[0].mxu0
  %v1795 = vadd.f32 %v1754, %v1794
  %v1796 = vpop.f32.mrb[0].mxu0
  %v1797 = vpop.f32.mrb[0].mxu0
  %1798 = vdwg.mxu0
  %1799 = vmatprep.subr.bf16.mxu0 %v1126
  %1800 = vmatpush1.bf16.msra.mxu0 %v1125
  %1801 = vmatprep.subr.bf16.mxu0 %v1130
  %1802 = vmatpush1.bf16.msra.mxu0 %v1129
  %1803 = vmatprep.subr.bf16.mxu0 %v1134
  %1804 = vmatpush1.bf16.msra.mxu0 %v1133
  %1805 = vmatprep.subr.bf16.mxu0 %v1138
  %1806 = vmatpush1.bf16.msra.mxu0 %v1137
  %1807 = vmatprep.subr.bf16.mxu0 %v1142
  %1808 = vmatpush1.bf16.msra.mxu0 %v1141
  %1809 = vmatprep.subr.bf16.mxu0 %v1146
  %1810 = vmatpush1.bf16.msra.mxu0 %v1145
  %1811 = vmatprep.subr.bf16.mxu0 %v1150
  %1812 = vmatpush1.bf16.msra.mxu0 %v1149
  %1813 = vmatprep.subr.bf16.mxu0 %v1154
  %1814 = vmatpush1.bf16.msra.mxu0 %v1153
  %1815 = vmatprep.subr.bf16.mxu0 %v1158
  %1816 = vmatpush1.bf16.msra.mxu0 %v1157
  %1817 = vmatprep.subr.bf16.mxu0 %v1162
  %1818 = vmatpush1.bf16.msra.mxu0 %v1161
  %1819 = vmatprep.subr.bf16.mxu0 %v1166
  %1820 = vmatpush1.bf16.msra.mxu0 %v1165
  %1821 = vmatprep.subr.bf16.mxu0 %v1170
  %1822 = vmatpush1.bf16.msra.mxu0 %v1169
  %1823 = vmatprep.subr.bf16.mxu0 %v1174
  %1824 = vmatpush1.bf16.msra.mxu0 %v1173
  %1825 = vmatprep.subr.bf16.mxu0 %v1178
  %1826 = vmatpush1.bf16.msra.mxu0 %v1177
  %1827 = vmatprep.subr.bf16.mxu0 %v1182
  %1828 = vmatpush1.bf16.msra.mxu0 %v1181
  %1829 = vmatprep.subr.bf16.mxu0 %v1186
  %1830 = vmatpush1.bf16.msra.mxu0 %v1185
  %1831 = vmatprep.mubr.bf16.mxu0 %v70
  %1832 = vmatmul.mubr.bf16.gmra.mrb[0].mxu0 %v69
  %v1833 = vpop.f32.mrb[0].mxu0
  %v1834 = vadd.f32 %v350, %v1833
  %v1835 = vpop.f32.mrb[0].mxu0
  %v1836 = vadd.f32 %v354, %v1835
  %v1837 = vpop.f32.mrb[0].mxu0
  %v1838 = vpop.f32.mrb[0].mxu0
  %1839 = vdwg.mxu0
  %1840 = vmatprep.subr.bf16.mxu0 %v1190
  %1841 = vmatpush1.bf16.msra.mxu0 %v1189
  %1842 = vmatprep.subr.bf16.mxu0 %v1194
  %1843 = vmatpush1.bf16.msra.mxu0 %v1193
  %1844 = vmatprep.subr.bf16.mxu0 %v1198
  %1845 = vmatpush1.bf16.msra.mxu0 %v1197
  %1846 = vmatprep.subr.bf16.mxu0 %v1202
  %1847 = vmatpush1.bf16.msra.mxu0 %v1201
  %1848 = vmatprep.subr.bf16.mxu0 %v1206
  %1849 = vmatpush1.bf16.msra.mxu0 %v1205
  %1850 = vmatprep.subr.bf16.mxu0 %v1210
  %1851 = vmatpush1.bf16.msra.mxu0 %v1209
  %1852 = vmatprep.subr.bf16.mxu0 %v1214
  %1853 = vmatpush1.bf16.msra.mxu0 %v1213
  %1854 = vmatprep.subr.bf16.mxu0 %v1218
  %1855 = vmatpush1.bf16.msra.mxu0 %v1217
  %1856 = vmatprep.subr.bf16.mxu0 %v1222
  %1857 = vmatpush1.bf16.msra.mxu0 %v1221
  %1858 = vmatprep.subr.bf16.mxu0 %v1226
  %1859 = vmatpush1.bf16.msra.mxu0 %v1225
  %1860 = vmatprep.subr.bf16.mxu0 %v1230
  %1861 = vmatpush1.bf16.msra.mxu0 %v1229
  %1862 = vmatprep.subr.bf16.mxu0 %v1234
  %1863 = vmatpush1.bf16.msra.mxu0 %v1233
  %1864 = vmatprep.subr.bf16.mxu0 %v1238
  %1865 = vmatpush1.bf16.msra.mxu0 %v1237
  %1866 = vmatprep.subr.bf16.mxu0 %v1242
  %1867 = vmatpush1.bf16.msra.mxu0 %v1241
  %1868 = vmatprep.subr.bf16.mxu0 %v1246
  %1869 = vmatpush1.bf16.msra.mxu0 %v1245
  %1870 = vmatprep.subr.bf16.mxu0 %v1250
  %1871 = vmatpush1.bf16.msra.mxu0 %v1249
  %1872 = vmatprep.mubr.bf16.mxu0 %v72
  %1873 = vmatmul.mubr.bf16.gmra.mrb[0].mxu0 %v71
  %v1874 = vpop.f32.mrb[0].mxu0
  %v1875 = vadd.f32 %v1834, %v1874
  %v1876 = vpop.f32.mrb[0].mxu0
  %v1877 = vadd.f32 %v1836, %v1876
  %v1878 = vpop.f32.mrb[0].mxu0
  %v1879 = vpop.f32.mrb[0].mxu0
  %1880 = vdwg.mxu0
  %1881 = vmatprep.subr.bf16.mxu0 %v1254
  %1882 = vmatpush1.bf16.msra.mxu0 %v1253
  %1883 = vmatprep.subr.bf16.mxu0 %v1258
  %1884 = vmatpush1.bf16.msra.mxu0 %v1257
  %1885 = vmatprep.subr.bf16.mxu0 %v1262
  %1886 = vmatpush1.bf16.msra.mxu0 %v1261
  %1887 = vmatprep.subr.bf16.mxu0 %v1266
  %1888 = vmatpush1.bf16.msra.mxu0 %v1265
  %1889 = vmatprep.subr.bf16.mxu0 %v1270
  %1890 = vmatpush1.bf16.msra.mxu0 %v1269
  %1891 = vmatprep.subr.bf16.mxu0 %v1274
  %1892 = vmatpush1.bf16.msra.mxu0 %v1273
  %1893 = vmatprep.subr.bf16.mxu0 %v1278
  %1894 = vmatpush1.bf16.msra.mxu0 %v1277
  %1895 = vmatprep.subr.bf16.mxu0 %v1282
  %1896 = vmatpush1.bf16.msra.mxu0 %v1281
  %1897 = vmatprep.subr.bf16.mxu0 %v1286
  %1898 = vmatpush1.bf16.msra.mxu0 %v1285
  %1899 = vmatprep.subr.bf16.mxu0 %v1290
  %1900 = vmatpush1.bf16.msra.mxu0 %v1289
  %1901 = vmatprep.subr.bf16.mxu0 %v1294
  %1902 = vmatpush1.bf16.msra.mxu0 %v1293
  %1903 = vmatprep.subr.bf16.mxu0 %v1298
  %1904 = vmatpush1.bf16.msra.mxu0 %v1297
  %1905 = vmatprep.subr.bf16.mxu0 %v1302
  %1906 = vmatpush1.bf16.msra.mxu0 %v1301
  %1907 = vmatprep.subr.bf16.mxu0 %v1306
  %1908 = vmatpush1.bf16.msra.mxu0 %v1305
  %1909 = vmatprep.subr.bf16.mxu0 %v1310
  %1910 = vmatpush1.bf16.msra.mxu0 %v1309
  %1911 = vmatprep.subr.bf16.mxu0 %v1314
  %1912 = vmatpush1.bf16.msra.mxu0 %v1313
  %1913 = vmatprep.mubr.bf16.mxu0 %v74
  %1914 = vmatmul.mubr.bf16.gmra.mrb[0].mxu0 %v73
  %v1915 = vpop.f32.mrb[0].mxu0
  %v1916 = vadd.f32 %v1875, %v1915
  %v1917 = vpop.f32.mrb[0].mxu0
  %v1918 = vadd.f32 %v1877, %v1917
  %v1919 = vpop.f32.mrb[0].mxu0
  %v1920 = vpop.f32.mrb[0].mxu0
  %1921 = vdwg.mxu0
  %1922 = vmatprep.subr.bf16.mxu0 %v1318
  %1923 = vmatpush1.bf16.msra.mxu0 %v1317
  %1924 = vmatprep.subr.bf16.mxu0 %v1322
  %1925 = vmatpush1.bf16.msra.mxu0 %v1321
  %1926 = vmatprep.subr.bf16.mxu0 %v1326
  %1927 = vmatpush1.bf16.msra.mxu0 %v1325
  %1928 = vmatprep.subr.bf16.mxu0 %v1330
  %1929 = vmatpush1.bf16.msra.mxu0 %v1329
  %1930 = vmatprep.subr.bf16.mxu0 %v1334
  %1931 = vmatpush1.bf16.msra.mxu0 %v1333
  %1932 = vmatprep.subr.bf16.mxu0 %v1338
  %1933 = vmatpush1.bf16.msra.mxu0 %v1337
  %1934 = vmatprep.subr.bf16.mxu0 %v1342
  %1935 = vmatpush1.bf16.msra.mxu0 %v1341
  %1936 = vmatprep.subr.bf16.mxu0 %v1346
  %1937 = vmatpush1.bf16.msra.mxu0 %v1345
  %1938 = vmatprep.subr.bf16.mxu0 %v1350
  %1939 = vmatpush1.bf16.msra.mxu0 %v1349
  %1940 = vmatprep.subr.bf16.mxu0 %v1354
  %1941 = vmatpush1.bf16.msra.mxu0 %v1353
  %1942 = vmatprep.subr.bf16.mxu0 %v1358
  %1943 = vmatpush1.bf16.msra.mxu0 %v1357
  %1944 = vmatprep.subr.bf16.mxu0 %v1362
  %1945 = vmatpush1.bf16.msra.mxu0 %v1361
  %1946 = vmatprep.subr.bf16.mxu0 %v1366
  %1947 = vmatpush1.bf16.msra.mxu0 %v1365
  %1948 = vmatprep.subr.bf16.mxu0 %v1370
  %1949 = vmatpush1.bf16.msra.mxu0 %v1369
  %1950 = vmatprep.subr.bf16.mxu0 %v1374
  %1951 = vmatpush1.bf16.msra.mxu0 %v1373
  %1952 = vmatprep.subr.bf16.mxu0 %v1378
  %1953 = vmatpush1.bf16.msra.mxu0 %v1377
  %1954 = vmatprep.mubr.bf16.mxu0 %v76
  %1955 = vmatmul.mubr.bf16.gmra.mrb[0].mxu0 %v75
  %v1956 = vpop.f32.mrb[0].mxu0
  %v1957 = vadd.f32 %v1916, %v1956
  %v1958 = vpop.f32.mrb[0].mxu0
  %v1959 = vadd.f32 %v1918, %v1958
  %v1960 = vpop.f32.mrb[0].mxu0
  %v1961 = vpop.f32.mrb[0].mxu0
  %1962 = vdwg.mxu0
  %v1963 = vmax.f32 %v1793, 0.0
  %v1964 = vmax.f32 %v1795, 0.0
  %v1965 = vmax.f32 %v1957, 0.0
  %v1966 = vmax.f32 %v1959, 0.0
  %v1967 = vpack.c.bf16 %v1963, %v1963
  %v1968 = vpack.c.bf16 %v1964, %v1964
  %v1969 = vpack.c.bf16 %v1965, %v1965
  %v1970 = vpack.c.bf16 %v1966, %v1966
  %v1971 = vld [vmem:[%s2] sm:$0xff]
  %v1972 = vld [vmem:[%s2 + $0x8] sm:$0xff]
  %v1973 = vld [vmem:[%s2 + $0x10] sm:$0xff]
  %v1974 = vld [vmem:[%s2 + $0x18] sm:$0xff]
  %v1975 = vld [vmem:[%s2 + $0x20] sm:$0xff]
  %v1976 = vld [vmem:[%s2 + $0x28] sm:$0xff]
  %v1977 = vld [vmem:[%s2 + $0x30] sm:$0xff]
  %v1978 = vld [vmem:[%s2 + $0x38] sm:$0xff]
  %v1979 = vld [vmem:[%s2 + $0x40] sm:$0xff]
  %v1980 = vld [vmem:[%s2 + $0x48] sm:$0xff]
  %v1981 = vld [vmem:[%s2 + $0x50] sm:$0xff]
  %v1982 = vld [vmem:[%s2 + $0x58] sm:$0xff]
  %v1983 = vld [vmem:[%s2 + $0x60] sm:$0xff]
  %v1984 = vld [vmem:[%s2 + $0x68] sm:$0xff]
  %v1985 = vld [vmem:[%s2 + $0x70] sm:$0xff]
  %v1986 = vld [vmem:[%s2 + $0x78] sm:$0xff]
  %v1987 = vld [vmem:[%s2 + $0x80] sm:$0xff]
  %v1988 = vld [vmem:[%s2 + $0x88] sm:$0xff]
  %v1989 = vld [vmem:[%s2 + $0x90] sm:$0xff]
  %v1990 = vld [vmem:[%s2 + $0x98] sm:$0xff]
  %v1991 = vld [vmem:[%s2 + $0xa0] sm:$0xff]
  %v1992 = vld [vmem:[%s2 + $0xa8] sm:$0xff]
  %v1993 = vld [vmem:[%s2 + $0xb0] sm:$0xff]
  %v1994 = vld [vmem:[%s2 + $0xb8] sm:$0xff]
  %v1995 = vld [vmem:[%s2 + $0xc0] sm:$0xff]
  %v1996 = vld [vmem:[%s2 + $0xc8] sm:$0xff]
  %v1997 = vld [vmem:[%s2 + $0xd0] sm:$0xff]
  %v1998 = vld [vmem:[%s2 + $0xd8] sm:$0xff]
  %v1999 = vld [vmem:[%s2 + $0xe0] sm:$0xff]
  %v2000 = vld [vmem:[%s2 + $0xe8] sm:$0xff]
  %v2001 = vld [vmem:[%s2 + $0xf0] sm:$0xff]
  %v2002 = vld [vmem:[%s2 + $0xf8] sm:$0xff]
  %v2003 = vld [vmem:[%s2 + $0x100] sm:$0xff]
  %v2004 = vld [vmem:[%s2 + $0x108] sm:$0xff]
  %v2005 = vld [vmem:[%s2 + $0x110] sm:$0xff]
  %v2006 = vld [vmem:[%s2 + $0x118] sm:$0xff]
  %v2007 = vld [vmem:[%s2 + $0x120] sm:$0xff]
  %v2008 = vld [vmem:[%s2 + $0x128] sm:$0xff]
  %v2009 = vld [vmem:[%s2 + $0x130] sm:$0xff]
  %v2010 = vld [vmem:[%s2 + $0x138] sm:$0xff]
  %v2011 = vld [vmem:[%s2 + $0x140] sm:$0xff]
  %v2012 = vld [vmem:[%s2 + $0x148] sm:$0xff]
  %v2013 = vld [vmem:[%s2 + $0x150] sm:$0xff]
  %v2014 = vld [vmem:[%s2 + $0x158] sm:$0xff]
  %v2015 = vld [vmem:[%s2 + $0x160] sm:$0xff]
  %v2016 = vld [vmem:[%s2 + $0x168] sm:$0xff]
  %v2017 = vld [vmem:[%s2 + $0x170] sm:$0xff]
  %v2018 = vld [vmem:[%s2 + $0x178] sm:$0xff]
  %v2019 = vld [vmem:[%s2 + $0x180] sm:$0xff]
  %v2020 = vld [vmem:[%s2 + $0x190] sm:$0x11]
  %v2021 = vunpack.c.l.bf16 %v2020
  %v2022 = vunpack.c.h.bf16 %v2020
  %v2023 = vlaneseq
  %v2024 = vshrl.u32 %v2023, 7
  %v2025 = vsub.s32 0, %v2024
  %v2026 = vrot.slane %v2021, %v2025
  %v2027 = vlaneseq
  %v2028 = vshrl.u32 %v2027, 7
  %v2029 = vsub.s32 0, %v2028
  %v2030 = vrot.slane %v2022, %v2029
  %v2080 = vunpack.c.l.b16 %v1971
  %v2081 = vunpack.c.h.b16 %v1971
  %v2082 = vunpack.c.l.b16 %v1972
  %v2083 = vunpack.c.h.b16 %v1972
  %v2084 = vunpack.c.l.b16 %v1973
  %v2085 = vunpack.c.h.b16 %v1973
  %v2086 = vunpack.c.l.b16 %v1974
  %v2087 = vunpack.c.h.b16 %v1974
  %v2088 = vunpack.c.l.b16 %v1975
  %v2089 = vunpack.c.h.b16 %v1975
  %v2090 = vunpack.c.l.b16 %v1976
  %v2091 = vunpack.c.h.b16 %v1976
  %v2092 = vunpack.c.l.b16 %v1977
  %v2093 = vunpack.c.h.b16 %v1977
  %v2094 = vunpack.c.l.b16 %v1978
  %v2095 = vunpack.c.h.b16 %v1978
  %v2096 = vunpack.c.l.b16 %v1979
  %v2097 = vunpack.c.h.b16 %v1979
  %v2098 = vunpack.c.l.b16 %v1980
  %v2099 = vunpack.c.h.b16 %v1980
  %v2100 = vunpack.c.l.b16 %v1981
  %v2101 = vunpack.c.h.b16 %v1981
  %v2102 = vunpack.c.l.b16 %v1982
  %v2103 = vunpack.c.h.b16 %v1982
  %v2104 = vunpack.c.l.b16 %v1983
  %v2105 = vunpack.c.h.b16 %v1983
  %v2106 = vunpack.c.l.b16 %v1984
  %v2107 = vunpack.c.h.b16 %v1984
  %v2108 = vunpack.c.l.b16 %v1985
  %v2109 = vunpack.c.h.b16 %v1985
  %v2110 = vunpack.c.l.b16 %v1986
  %v2111 = vunpack.c.h.b16 %v1986
  %v2112 = vunpack.c.l.b16 %v1987
  %v2113 = vunpack.c.h.b16 %v1987
  %v2114 = vunpack.c.l.b16 %v1988
  %v2115 = vunpack.c.h.b16 %v1988
  %v2116 = vunpack.c.l.b16 %v1989
  %v2117 = vunpack.c.h.b16 %v1989
  %v2118 = vunpack.c.l.b16 %v1990
  %v2119 = vunpack.c.h.b16 %v1990
  %v2120 = vunpack.c.l.b16 %v1991
  %v2121 = vunpack.c.h.b16 %v1991
  %v2122 = vunpack.c.l.b16 %v1992
  %v2123 = vunpack.c.h.b16 %v1992
  %v2124 = vunpack.c.l.b16 %v1993
  %v2125 = vunpack.c.h.b16 %v1993
  %v2126 = vunpack.c.l.b16 %v1994
  %v2127 = vunpack.c.h.b16 %v1994
  %v2128 = vunpack.c.l.b16 %v1995
  %v2129 = vunpack.c.h.b16 %v1995
  %v2130 = vunpack.c.l.b16 %v1996
  %v2131 = vunpack.c.h.b16 %v1996
  %v2132 = vunpack.c.l.b16 %v1997
  %v2133 = vunpack.c.h.b16 %v1997
  %v2134 = vunpack.c.l.b16 %v1998
  %v2135 = vunpack.c.h.b16 %v1998
  %v2136 = vunpack.c.l.b16 %v1999
  %v2137 = vunpack.c.h.b16 %v1999
  %v2138 = vunpack.c.l.b16 %v2000
  %v2139 = vunpack.c.h.b16 %v2000
  %v2140 = vunpack.c.l.b16 %v2001
  %v2141 = vunpack.c.h.b16 %v2001
  %v2142 = vunpack.c.l.b16 %v2002
  %v2143 = vunpack.c.h.b16 %v2002
  %v2144 = vunpack.c.l.b16 %v2003
  %v2145 = vunpack.c.h.b16 %v2003
  %v2146 = vunpack.c.l.b16 %v2004
  %v2147 = vunpack.c.h.b16 %v2004
  %v2148 = vunpack.c.l.b16 %v2005
  %v2149 = vunpack.c.h.b16 %v2005
  %v2150 = vunpack.c.l.b16 %v2006
  %v2151 = vunpack.c.h.b16 %v2006
  %v2152 = vunpack.c.l.b16 %v2007
  %v2153 = vunpack.c.h.b16 %v2007
  %v2154 = vunpack.c.l.b16 %v2008
  %v2155 = vunpack.c.h.b16 %v2008
  %v2156 = vunpack.c.l.b16 %v2009
  %v2157 = vunpack.c.h.b16 %v2009
  %v2158 = vunpack.c.l.b16 %v2010
  %v2159 = vunpack.c.h.b16 %v2010
  %v2160 = vunpack.c.l.b16 %v2011
  %v2161 = vunpack.c.h.b16 %v2011
  %v2162 = vunpack.c.l.b16 %v2012
  %v2163 = vunpack.c.h.b16 %v2012
  %v2164 = vunpack.c.l.b16 %v2013
  %v2165 = vunpack.c.h.b16 %v2013
  %v2166 = vunpack.c.l.b16 %v2014
  %v2167 = vunpack.c.h.b16 %v2014
  %v2168 = vunpack.c.l.b16 %v2015
  %v2169 = vunpack.c.h.b16 %v2015
  %v2170 = vunpack.c.l.b16 %v2016
  %v2171 = vunpack.c.h.b16 %v2016
  %v2172 = vunpack.c.l.b16 %v2017
  %v2173 = vunpack.c.h.b16 %v2017
  %v2174 = vunpack.c.l.b16 %v2018
  %v2175 = vunpack.c.h.b16 %v2018
  %v2176 = vunpack.c.l.b16 %v2019
  %v2177 = vunpack.c.h.b16 %v2019
  %v2178 = vpack.c.b16 %v2082, %v2080
  %v2179 = vpack.c.b16 %v2083, %v2081
  %v2180 = vpack.c.b16 %v2086, %v2084
  %v2181 = vpack.c.b16 %v2087, %v2085
  %v2182 = vpack.c.b16 %v2090, %v2088
  %v2183 = vpack.c.b16 %v2091, %v2089
  %v2184 = vpack.c.b16 %v2094, %v2092
  %v2185 = vpack.c.b16 %v2095, %v2093
  %v2186 = vpack.c.b16 %v2098, %v2096
  %v2187 = vpack.c.b16 %v2099, %v2097
  %v2188 = vpack.c.b16 %v2102, %v2100
  %v2189 = vpack.c.b16 %v2103, %v2101
  %v2190 = vpack.c.b16 %v2106, %v2104
  %v2191 = vpack.c.b16 %v2107, %v2105
  %v2192 = vpack.c.b16 %v2110, %v2108
  %v2193 = vpack.c.b16 %v2111, %v2109
  %v2194 = vpack.c.b16 %v2114, %v2112
  %v2195 = vpack.c.b16 %v2115, %v2113
  %v2196 = vpack.c.b16 %v2118, %v2116
  %v2197 = vpack.c.b16 %v2119, %v2117
  %v2198 = vpack.c.b16 %v2122, %v2120
  %v2199 = vpack.c.b16 %v2123, %v2121
  %v2200 = vpack.c.b16 %v2126, %v2124
  %v2201 = vpack.c.b16 %v2127, %v2125
  %v2202 = vpack.c.b16 %v2130, %v2128
  %v2203 = vpack.c.b16 %v2131, %v2129
  %v2204 = vpack.c.b16 %v2134, %v2132
  %v2205 = vpack.c.b16 %v2135, %v2133
  %v2206 = vpack.c.b16 %v2138, %v2136
  %v2207 = vpack.c.b16 %v2139, %v2137
  %v2208 = vpack.c.b16 %v2142, %v2140
  %v2209 = vpack.c.b16 %v2143, %v2141
  %v2210 = vpack.c.b16 %v2146, %v2144
  %v2211 = vpack.c.b16 %v2147, %v2145
  %v2212 = vpack.c.b16 %v2150, %v2148
  %v2213 = vpack.c.b16 %v2151, %v2149
  %v2214 = vpack.c.b16 %v2154, %v2152
  %v2215 = vpack.c.b16 %v2155, %v2153
  %v2216 = vpack.c.b16 %v2158, %v2156
  %v2217 = vpack.c.b16 %v2159, %v2157
  %v2218 = vpack.c.b16 %v2162, %v2160
  %v2219 = vpack.c.b16 %v2163, %v2161
  %v2220 = vpack.c.b16 %v2166, %v2164
  %v2221 = vpack.c.b16 %v2167, %v2165
  %v2222 = vpack.c.b16 %v2170, %v2168
  %v2223 = vpack.c.b16 %v2171, %v2169
  %v2224 = vpack.c.b16 %v2174, %v2172
  %v2225 = vpack.c.b16 %v2175, %v2173
  %v2226 = vpack.c.b16 %v2176, %v2176
  %v2227 = vpack.c.b16 %v2177, %v2177
  %vm2276 = vcmask 64512
  %v2278 = vsel %vm2276, %v1970, 0
  %vm2280 = vcmask 1043456
  %v2282 = vsel %vm2280, %v2226, 0
  %v2285 = vsel %vm2280, %v2227, 0
  %2287 = vmatprep.subr.bf16.mxu0 %v2179
  %2288 = vmatpush1.bf16.msra.mxu0 %v2178
  %2289 = vmatprep.subr.bf16.mxu0 %v2181
  %2290 = vmatpush1.bf16.msra.mxu0 %v2180
  %2291 = vmatprep.subr.bf16.mxu0 %v2183
  %2292 = vmatpush1.bf16.msra.mxu0 %v2182
  %2293 = vmatprep.subr.bf16.mxu0 %v2185
  %2294 = vmatpush1.bf16.msra.mxu0 %v2184
  %2295 = vmatprep.subr.bf16.mxu0 %v2187
  %2296 = vmatpush1.bf16.msra.mxu0 %v2186
  %2297 = vmatprep.subr.bf16.mxu0 %v2189
  %2298 = vmatpush1.bf16.msra.mxu0 %v2188
  %2299 = vmatprep.subr.bf16.mxu0 %v2191
  %2300 = vmatpush1.bf16.msra.mxu0 %v2190
  %2301 = vmatprep.subr.bf16.mxu0 %v2193
  %2302 = vmatpush1.bf16.msra.mxu0 %v2192
  %2303 = vmatprep.subr.bf16.mxu0 %v2195
  %2304 = vmatpush1.bf16.msra.mxu0 %v2194
  %2305 = vmatprep.subr.bf16.mxu0 %v2197
  %2306 = vmatpush1.bf16.msra.mxu0 %v2196
  %2307 = vmatprep.subr.bf16.mxu0 %v2199
  %2308 = vmatpush1.bf16.msra.mxu0 %v2198
  %2309 = vmatprep.subr.bf16.mxu0 %v2201
  %2310 = vmatpush1.bf16.msra.mxu0 %v2200
  %2311 = vmatprep.subr.bf16.mxu0 %v2203
  %2312 = vmatpush1.bf16.msra.mxu0 %v2202
  %2313 = vmatprep.subr.bf16.mxu0 %v2205
  %2314 = vmatpush1.bf16.msra.mxu0 %v2204
  %2315 = vmatprep.subr.bf16.mxu0 %v2207
  %2316 = vmatpush1.bf16.msra.mxu0 %v2206
  %2317 = vmatprep.subr.bf16.mxu0 %v2209
  %2318 = vmatpush1.bf16.msra.mxu0 %v2208
  %2319 = vmatprep.mubr.bf16.mxu0 %v1968
  %2320 = vmatmul.mubr.bf16.gmra.mrb[0].mxu0 %v1967
  %v2321 = vpop.f32.mrb[0].mxu0
  %v2322 = vadd.f32 %v2026, %v2321
  %v2323 = vpop.f32.mrb[0].mxu0
  %v2324 = vadd.f32 %v2030, %v2323
  %v2325 = vpop.f32.mrb[0].mxu0
  %v2326 = vpop.f32.mrb[0].mxu0
  %2327 = vdwg.mxu0
  %2328 = vmatprep.subr.bf16.mxu0 %v2211
  %2329 = vmatpush1.bf16.msra.mxu0 %v2210
  %2330 = vmatprep.subr.bf16.mxu0 %v2213
  %2331 = vmatpush1.bf16.msra.mxu0 %v2212
  %2332 = vmatprep.subr.bf16.mxu0 %v2215
  %2333 = vmatpush1.bf16.msra.mxu0 %v2214
  %2334 = vmatprep.subr.bf16.mxu0 %v2217
  %2335 = vmatpush1.bf16.msra.mxu0 %v2216
  %2336 = vmatprep.subr.bf16.mxu0 %v2219
  %2337 = vmatpush1.bf16.msra.mxu0 %v2218
  %2338 = vmatprep.subr.bf16.mxu0 %v2221
  %2339 = vmatpush1.bf16.msra.mxu0 %v2220
  %2340 = vmatprep.subr.bf16.mxu0 %v2223
  %2341 = vmatpush1.bf16.msra.mxu0 %v2222
  %2342 = vmatprep.subr.bf16.mxu0 %v2225
  %2343 = vmatpush1.bf16.msra.mxu0 %v2224
  %2344 = vmatprep.subr.bf16.mxu0 %v2285
  %2345 = vmatpush1.bf16.msra.mxu0 %v2282
  %2346 = vmatprep.subr.bf16.mxu0 0
  %2347 = vmatpush1.bf16.msra.mxu0 0
  %2348 = vmatprep.subr.bf16.mxu0 0
  %2349 = vmatpush1.bf16.msra.mxu0 0
  %2350 = vmatprep.subr.bf16.mxu0 0
  %2351 = vmatpush1.bf16.msra.mxu0 0
  %2352 = vmatprep.subr.bf16.mxu0 0
  %2353 = vmatpush1.bf16.msra.mxu0 0
  %2354 = vmatprep.subr.bf16.mxu0 0
  %2355 = vmatpush1.bf16.msra.mxu0 0
  %2356 = vmatprep.subr.bf16.mxu0 0
  %2357 = vmatpush1.bf16.msra.mxu0 0
  %2358 = vmatprep.subr.bf16.mxu0 0
  %2359 = vmatpush1.bf16.msra.mxu0 0
  %2360 = vmatprep.mubr.bf16.mxu0 %v2278
  %2361 = vmatmul.mubr.bf16.gmra.mrb[0].mxu0 %v1969
  %v2362 = vpop.f32.mrb[0].mxu0
  %v2363 = vadd.f32 %v2322, %v2362
  %v2364 = vpop.f32.mrb[0].mxu0
  %v2365 = vadd.f32 %v2324, %v2364
  %v2366 = vpop.f32.mrb[0].mxu0
  %v2367 = vpop.f32.mrb[0].mxu0
  %2368 = vdwg.mxu0
  %v2369 = vmax.f32 %v2363, 0.0
  %v2370 = vmax.f32 %v2365, 0.0
  %v2371 = vld [vmem:[%s3] sm:$0xff]
  %v2372 = vld [vmem:[%s3 + $0x8] sm:$0xff]
  %v2373 = vld [vmem:[%s3 + $0x10] sm:$0xff]
  %v2374 = vld [vmem:[%s3 + $0x18] sm:$0xff]
  %v2375 = vld [vmem:[%s3 + $0x20] sm:$0xff]
  %v2376 = vld [vmem:[%s3 + $0x28] sm:$0xff]
  %v2377 = vld [vmem:[%s3 + $0x30] sm:$0xff]
  %v2378 = vld [vmem:[%s3 + $0x38] sm:$0xff]
  %v2379 = vld [vmem:[%s3 + $0x40] sm:$0xff]
  %v2380 = vld [vmem:[%s3 + $0x48] sm:$0xff]
  %v2381 = vld [vmem:[%s3 + $0x50] sm:$0xff]
  %v2382 = vld [vmem:[%s3 + $0x58] sm:$0xff]
  %v2383 = vld [vmem:[%s3 + $0x60] sm:$0xff]
  %v2384 = vld [vmem:[%s3 + $0x68] sm:$0xff]
  %v2385 = vld [vmem:[%s3 + $0x70] sm:$0xff]
  %v2386 = vld [vmem:[%s3 + $0x78] sm:$0xff]
  %v2387 = vld [vmem:[%s3 + $0x80] sm:$0xff]
  %v2388 = vld [vmem:[%s3 + $0x88] sm:$0xff]
  %v2389 = vld [vmem:[%s3 + $0x90] sm:$0xff]
  %v2390 = vld [vmem:[%s3 + $0x98] sm:$0xff]
  %v2391 = vld [vmem:[%s3 + $0xa0] sm:$0xff]
  %v2392 = vld [vmem:[%s3 + $0xa8] sm:$0xff]
  %v2393 = vld [vmem:[%s3 + $0xb0] sm:$0xff]
  %v2394 = vld [vmem:[%s3 + $0xb8] sm:$0xff]
  %v2395 = vld [vmem:[%s3 + $0xc0] sm:$0xff]
  %v2396 = vld [vmem:[%s3 + $0xc8] sm:$0x1]
  %v2397 = vlaneseq
  %v2398 = vshrl.u32 %v2397, 7
  %v2399 = vsub.s32 0, %v2398
  %v2400 = vrot.slane %v2396, %v2399
  %vm2401 = vcmask 588800
  %v2403 = vsel %vm2401, %v2370, 0
  %2405 = vmatprep.subr.mxu0 0.0
  %2406 = vmatpush1.msra.mxu0 %v2371
  %2407 = vmatprep.subr.mxu0 0.0
  %2408 = vmatpush1.msra.mxu0 %v2372
  %2409 = vmatprep.subr.mxu0 0.0
  %2410 = vmatpush1.msra.mxu0 %v2373
  %2411 = vmatprep.subr.mxu0 0.0
  %2412 = vmatpush1.msra.mxu0 %v2374
  %2413 = vmatprep.subr.mxu0 0.0
  %2414 = vmatpush1.msra.mxu0 %v2375
  %2415 = vmatprep.subr.mxu0 0.0
  %2416 = vmatpush1.msra.mxu0 %v2376
  %2417 = vmatprep.subr.mxu0 0.0
  %2418 = vmatpush1.msra.mxu0 %v2377
  %2419 = vmatprep.subr.mxu0 0.0
  %2420 = vmatpush1.msra.mxu0 %v2378
  %2421 = vmatprep.subr.mxu0 0.0
  %2422 = vmatpush1.msra.mxu0 %v2379
  %2423 = vmatprep.subr.mxu0 0.0
  %2424 = vmatpush1.msra.mxu0 %v2380
  %2425 = vmatprep.subr.mxu0 0.0
  %2426 = vmatpush1.msra.mxu0 %v2381
  %2427 = vmatprep.subr.mxu0 0.0
  %2428 = vmatpush1.msra.mxu0 %v2382
  %2429 = vmatprep.subr.mxu0 0.0
  %2430 = vmatpush1.msra.mxu0 %v2383
  %2431 = vmatprep.subr.mxu0 0.0
  %2432 = vmatpush1.msra.mxu0 %v2384
  %2433 = vmatprep.subr.mxu0 0.0
  %2434 = vmatpush1.msra.mxu0 %v2385
  %2435 = vmatprep.subr.mxu0 0.0
  %2436 = vmatpush1.msra.mxu0 %v2386
  %2437 = vmatprep.subr.mxu0 0.0
  %2438 = vmatpush1.msra.mxu0 %v2387
  %2439 = vmatprep.subr.mxu0 0.0
  %2440 = vmatpush1.msra.mxu0 %v2388
  %2441 = vmatprep.subr.mxu0 0.0
  %2442 = vmatpush1.msra.mxu0 %v2389
  %2443 = vmatprep.subr.mxu0 0.0
  %2444 = vmatpush1.msra.mxu0 %v2390
  %2445 = vmatprep.subr.mxu0 0.0
  %2446 = vmatpush1.msra.mxu0 %v2391
  %2447 = vmatprep.subr.mxu0 0.0
  %2448 = vmatpush1.msra.mxu0 %v2392
  %2449 = vmatprep.subr.mxu0 0.0
  %2450 = vmatpush1.msra.mxu0 %v2393
  %2451 = vmatprep.subr.mxu0 0.0
  %2452 = vmatpush1.msra.mxu0 %v2394
  %2453 = vmatprep.subr.mxu0 0.0
  %2454 = vmatpush1.msra.mxu0 %v2395
  %2455 = vmatprep.subr.mxu0 0.0
  %2456 = vmatpush1.msra.mxu0 0.0
  %2457 = vmatprep.subr.mxu0 0.0
  %2458 = vmatpush1.msra.mxu0 0.0
  %2459 = vmatprep.subr.mxu0 0.0
  %2460 = vmatpush1.msra.mxu0 0.0
  %2461 = vmatprep.subr.mxu0 0.0
  %2462 = vmatpush1.msra.mxu0 0.0
  %2463 = vmatprep.subr.mxu0 0.0
  %2464 = vmatpush1.msra.mxu0 0.0
  %2465 = vmatprep.subr.mxu0 0.0
  %2466 = vmatpush1.msra.mxu0 0.0
  %2467 = vmatprep.subr.mxu0 0.0
  %2468 = vmatpush1.msra.mxu0 0.0
  %2469 = vmatprep.mubr.f32.mxu0 %v2403
  %2470 = vmatmul.mubr.f32.gmra.mrb[0].mxu0 %v2369
  %v2471 = vpop.f32.mrb[0].mxu0
  %v2472 = vadd.f32 %v2400, %v2471
  %v2473 = vpop.f32.mrb[0].mxu0
  %2474 = vdwg.mxu0
  %vm2475 = vcmask 254976
  %v2476 = vsel %vm2475, %v2472, 0.0
  %2477 = vadd.xlane.f32.xlu0 %v2476
  %v2478 = vpop.xlane.xlu0 %2477
  %v2479 = vrcp.pop 32.0
  %v2480 = vmul.f32 %v2478, %v2479
  %v2481 = vsub.f32 %v2472, %v2480
  %v2482 = vmul.f32 %v2481, %v2481
  %v2483 = vsel %vm2475, %v2482, 0.0
  %2484 = vadd.xlane.f32.xlu0 %v2483
  %v2485 = vpop.xlane.xlu0 %2484
  %v2486 = vmul.f32 %v2485, %v2479
  %v2487 = vadd.f32 %v2486, 1e-05
  %v2488 = vrsqrt.pop %v2487
  %v2489 = vmul.f32 %v2481, %v2488
  %v2490 = vld [vmem:[%s3 + $0xd0] sm:$0x1]
  %v2491 = vlaneseq
  %v2492 = vshrl.u32 %v2491, 7
  %v2493 = vsub.s32 0, %v2492
  %v2494 = vrot.slane %v2490, %v2493
  %v2495 = vmul.f32 %v2489, %v2494
  %v2496 = vld [vmem:[%s3 + $0xd8] sm:$0x1]
  %v2497 = vlaneseq
  %v2498 = vshrl.u32 %v2497, 7
  %v2499 = vsub.s32 0, %v2498
  %v2500 = vrot.slane %v2496, %v2499
  %v2501 = vadd.f32 %v2495, %v2500
  %v2502 = vtanh.pop %v2501
  %v2503 = vld [vmem:[%s3 + $0xe0] sm:$0xff]
  %v2504 = vld [vmem:[%s3 + $0xe8] sm:$0xff]
  %v2505 = vld [vmem:[%s3 + $0xf0] sm:$0xff]
  %v2506 = vld [vmem:[%s3 + $0xf8] sm:$0xff]
  %v2507 = vld [vmem:[%s3 + $0x100] sm:$0x1]
  %v2508 = vlaneseq
  %v2509 = vshrl.u32 %v2508, 7
  %v2510 = vsub.s32 0, %v2509
  %v2511 = vrot.slane %v2507, %v2510
  %vm2512 = vcmask 261120
  %v2514 = vsel %vm2512, %v2502, 0
  %2516 = vmatprep.subr.mxu0 0.0
  %2517 = vmatpush1.msra.mxu0 %v2503
  %2518 = vmatprep.subr.mxu0 0.0
  %2519 = vmatpush1.msra.mxu0 %v2504
  %2520 = vmatprep.subr.mxu0 0.0
  %2521 = vmatpush1.msra.mxu0 %v2505
  %2522 = vmatprep.subr.mxu0 0.0
  %2523 = vmatpush1.msra.mxu0 %v2506
  %2524 = vmatprep.subr.mxu0 0.0
  %2525 = vmatpush1.msra.mxu0 0.0
  %2526 = vmatprep.subr.mxu0 0.0
  %2527 = vmatpush1.msra.mxu0 0.0
  %2528 = vmatprep.subr.mxu0 0.0
  %2529 = vmatpush1.msra.mxu0 0.0
  %2530 = vmatprep.subr.mxu0 0.0
  %2531 = vmatpush1.msra.mxu0 0.0
  %2532 = vmatprep.subr.mxu0 0.0
  %2533 = vmatpush1.msra.mxu0 0.0
  %2534 = vmatprep.subr.mxu0 0.0
  %2535 = vmatpush1.msra.mxu0 0.0
  %2536 = vmatprep.subr.mxu0 0.0
  %2537 = vmatpush1.msra.mxu0 0.0
  %2538 = vmatprep.subr.mxu0 0.0
  %2539 = vmatpush1.msra.mxu0 0.0
  %2540 = vmatprep.subr.mxu0 0.0
  %2541 = vmatpush1.msra.mxu0 0.0
  %2542 = vmatprep.subr.mxu0 0.0
  %2543 = vmatpush1.msra.mxu0 0.0
  %2544 = vmatprep.subr.mxu0 0.0
  %2545 = vmatpush1.msra.mxu0 0.0
  %2546 = vmatprep.subr.mxu0 0.0
  %2547 = vmatpush1.msra.mxu0 0.0
  %2548 = vmatprep.subr.mxu0 0.0
  %2549 = vmatpush1.msra.mxu0 0.0
  %2550 = vmatprep.subr.mxu0 0.0
  %2551 = vmatpush1.msra.mxu0 0.0
  %2552 = vmatprep.subr.mxu0 0.0
  %2553 = vmatpush1.msra.mxu0 0.0
  %2554 = vmatprep.subr.mxu0 0.0
  %2555 = vmatpush1.msra.mxu0 0.0
  %2556 = vmatprep.subr.mxu0 0.0
  %2557 = vmatpush1.msra.mxu0 0.0
  %2558 = vmatprep.subr.mxu0 0.0
  %2559 = vmatpush1.msra.mxu0 0.0
  %2560 = vmatprep.subr.mxu0 0.0
  %2561 = vmatpush1.msra.mxu0 0.0
  %2562 = vmatprep.subr.mxu0 0.0
  %2563 = vmatpush1.msra.mxu0 0.0
  %2564 = vmatprep.subr.mxu0 0.0
  %2565 = vmatpush1.msra.mxu0 0.0
  %2566 = vmatprep.subr.mxu0 0.0
  %2567 = vmatpush1.msra.mxu0 0.0
  %2568 = vmatprep.subr.mxu0 0.0
  %2569 = vmatpush1.msra.mxu0 0.0
  %2570 = vmatprep.subr.mxu0 0.0
  %2571 = vmatpush1.msra.mxu0 0.0
  %2572 = vmatprep.subr.mxu0 0.0
  %2573 = vmatpush1.msra.mxu0 0.0
  %2574 = vmatprep.subr.mxu0 0.0
  %2575 = vmatpush1.msra.mxu0 0.0
  %2576 = vmatprep.subr.mxu0 0.0
  %2577 = vmatpush1.msra.mxu0 0.0
  %2578 = vmatprep.subr.mxu0 0.0
  %2579 = vmatpush1.msra.mxu0 0.0
  %2580 = vmatprep.mubr.f32.mxu0 0.0
  %2581 = vmatmul.mubr.f32.gmra.mrb[0].mxu0 %v2514
  %v2582 = vpop.f32.mrb[0].mxu0
  %v2583 = vadd.f32 %v2511, %v2582
  %v2584 = vpop.f32.mrb[0].mxu0
  %2585 = vdwg.mxu0
  %v2586 = vmax.f32 %v2583, 0.0
  %v2587 = vld [vmem:[%s3 + $0x108] sm:$0xff]
  %v2588 = vld [vmem:[%s3 + $0x110] sm:$0xff]
  %v2589 = vld [vmem:[%s3 + $0x118] sm:$0xff]
  %v2590 = vld [vmem:[%s3 + $0x120] sm:$0xff]
  %v2591 = vld [vmem:[%s3 + $0x128] sm:$0x1]
  %v2592 = vlaneseq
  %v2593 = vshrl.u32 %v2592, 7
  %v2594 = vsub.s32 0, %v2593
  %v2595 = vrot.slane %v2591, %v2594
  %v2597 = vsel %vm2512, %v2586, 0
  %2599 = vmatprep.subr.mxu0 0.0
  %2600 = vmatpush1.msra.mxu0 %v2587
  %2601 = vmatprep.subr.mxu0 0.0
  %2602 = vmatpush1.msra.mxu0 %v2588
  %2603 = vmatprep.subr.mxu0 0.0
  %2604 = vmatpush1.msra.mxu0 %v2589
  %2605 = vmatprep.subr.mxu0 0.0
  %2606 = vmatpush1.msra.mxu0 %v2590
  %2607 = vmatprep.subr.mxu0 0.0
  %2608 = vmatpush1.msra.mxu0 0.0
  %2609 = vmatprep.subr.mxu0 0.0
  %2610 = vmatpush1.msra.mxu0 0.0
  %2611 = vmatprep.subr.mxu0 0.0
  %2612 = vmatpush1.msra.mxu0 0.0
  %2613 = vmatprep.subr.mxu0 0.0
  %2614 = vmatpush1.msra.mxu0 0.0
  %2615 = vmatprep.subr.mxu0 0.0
  %2616 = vmatpush1.msra.mxu0 0.0
  %2617 = vmatprep.subr.mxu0 0.0
  %2618 = vmatpush1.msra.mxu0 0.0
  %2619 = vmatprep.subr.mxu0 0.0
  %2620 = vmatpush1.msra.mxu0 0.0
  %2621 = vmatprep.subr.mxu0 0.0
  %2622 = vmatpush1.msra.mxu0 0.0
  %2623 = vmatprep.subr.mxu0 0.0
  %2624 = vmatpush1.msra.mxu0 0.0
  %2625 = vmatprep.subr.mxu0 0.0
  %2626 = vmatpush1.msra.mxu0 0.0
  %2627 = vmatprep.subr.mxu0 0.0
  %2628 = vmatpush1.msra.mxu0 0.0
  %2629 = vmatprep.subr.mxu0 0.0
  %2630 = vmatpush1.msra.mxu0 0.0
  %2631 = vmatprep.subr.mxu0 0.0
  %2632 = vmatpush1.msra.mxu0 0.0
  %2633 = vmatprep.subr.mxu0 0.0
  %2634 = vmatpush1.msra.mxu0 0.0
  %2635 = vmatprep.subr.mxu0 0.0
  %2636 = vmatpush1.msra.mxu0 0.0
  %2637 = vmatprep.subr.mxu0 0.0
  %2638 = vmatpush1.msra.mxu0 0.0
  %2639 = vmatprep.subr.mxu0 0.0
  %2640 = vmatpush1.msra.mxu0 0.0
  %2641 = vmatprep.subr.mxu0 0.0
  %2642 = vmatpush1.msra.mxu0 0.0
  %2643 = vmatprep.subr.mxu0 0.0
  %2644 = vmatpush1.msra.mxu0 0.0
  %2645 = vmatprep.subr.mxu0 0.0
  %2646 = vmatpush1.msra.mxu0 0.0
  %2647 = vmatprep.subr.mxu0 0.0
  %2648 = vmatpush1.msra.mxu0 0.0
  %2649 = vmatprep.subr.mxu0 0.0
  %2650 = vmatpush1.msra.mxu0 0.0
  %2651 = vmatprep.subr.mxu0 0.0
  %2652 = vmatpush1.msra.mxu0 0.0
  %2653 = vmatprep.subr.mxu0 0.0
  %2654 = vmatpush1.msra.mxu0 0.0
  %2655 = vmatprep.subr.mxu0 0.0
  %2656 = vmatpush1.msra.mxu0 0.0
  %2657 = vmatprep.subr.mxu0 0.0
  %2658 = vmatpush1.msra.mxu0 0.0
  %2659 = vmatprep.subr.mxu0 0.0
  %2660 = vmatpush1.msra.mxu0 0.0
  %2661 = vmatprep.subr.mxu0 0.0
  %2662 = vmatpush1.msra.mxu0 0.0
  %2663 = vmatprep.mubr.f32.mxu0 0.0
  %2664 = vmatmul.mubr.f32.gmra.mrb[0].mxu0 %v2597
  %v2665 = vpop.f32.mrb[0].mxu0
  %v2666 = vadd.f32 %v2595, %v2665
  %v2667 = vpop.f32.mrb[0].mxu0
  %2668 = vdwg.mxu0
  %v2669 = vmax.f32 %v2666, 0.0
  %v2670 = vld [vmem:[%s3 + $0x130] sm:$0xff]
  %v2671 = vld [vmem:[%s3 + $0x138] sm:$0xff]
  %v2672 = vld [vmem:[%s3 + $0x140] sm:$0xff]
  %v2673 = vld [vmem:[%s3 + $0x148] sm:$0xff]
  %v2674 = vld [vmem:[%s3 + $0x150] sm:$0x1]
  %v2675 = vlaneseq
  %v2676 = vshrl.u32 %v2675, 7
  %v2677 = vsub.s32 0, %v2676
  %v2678 = vrot.slane %v2674, %v2677
  %v2680 = vsel %vm2512, %v2669, 0
  %2682 = vmatprep.subr.mxu0 0.0
  %2683 = vmatpush1.msra.mxu0 %v2670
  %2684 = vmatprep.subr.mxu0 0.0
  %2685 = vmatpush1.msra.mxu0 %v2671
  %2686 = vmatprep.subr.mxu0 0.0
  %2687 = vmatpush1.msra.mxu0 %v2672
  %2688 = vmatprep.subr.mxu0 0.0
  %2689 = vmatpush1.msra.mxu0 %v2673
  %2690 = vmatprep.subr.mxu0 0.0
  %2691 = vmatpush1.msra.mxu0 0.0
  %2692 = vmatprep.subr.mxu0 0.0
  %2693 = vmatpush1.msra.mxu0 0.0
  %2694 = vmatprep.subr.mxu0 0.0
  %2695 = vmatpush1.msra.mxu0 0.0
  %2696 = vmatprep.subr.mxu0 0.0
  %2697 = vmatpush1.msra.mxu0 0.0
  %2698 = vmatprep.subr.mxu0 0.0
  %2699 = vmatpush1.msra.mxu0 0.0
  %2700 = vmatprep.subr.mxu0 0.0
  %2701 = vmatpush1.msra.mxu0 0.0
  %2702 = vmatprep.subr.mxu0 0.0
  %2703 = vmatpush1.msra.mxu0 0.0
  %2704 = vmatprep.subr.mxu0 0.0
  %2705 = vmatpush1.msra.mxu0 0.0
  %2706 = vmatprep.subr.mxu0 0.0
  %2707 = vmatpush1.msra.mxu0 0.0
  %2708 = vmatprep.subr.mxu0 0.0
  %2709 = vmatpush1.msra.mxu0 0.0
  %2710 = vmatprep.subr.mxu0 0.0
  %2711 = vmatpush1.msra.mxu0 0.0
  %2712 = vmatprep.subr.mxu0 0.0
  %2713 = vmatpush1.msra.mxu0 0.0
  %2714 = vmatprep.subr.mxu0 0.0
  %2715 = vmatpush1.msra.mxu0 0.0
  %2716 = vmatprep.subr.mxu0 0.0
  %2717 = vmatpush1.msra.mxu0 0.0
  %2718 = vmatprep.subr.mxu0 0.0
  %2719 = vmatpush1.msra.mxu0 0.0
  %2720 = vmatprep.subr.mxu0 0.0
  %2721 = vmatpush1.msra.mxu0 0.0
  %2722 = vmatprep.subr.mxu0 0.0
  %2723 = vmatpush1.msra.mxu0 0.0
  %2724 = vmatprep.subr.mxu0 0.0
  %2725 = vmatpush1.msra.mxu0 0.0
  %2726 = vmatprep.subr.mxu0 0.0
  %2727 = vmatpush1.msra.mxu0 0.0
  %2728 = vmatprep.subr.mxu0 0.0
  %2729 = vmatpush1.msra.mxu0 0.0
  %2730 = vmatprep.subr.mxu0 0.0
  %2731 = vmatpush1.msra.mxu0 0.0
  %2732 = vmatprep.subr.mxu0 0.0
  %2733 = vmatpush1.msra.mxu0 0.0
  %2734 = vmatprep.subr.mxu0 0.0
  %2735 = vmatpush1.msra.mxu0 0.0
  %2736 = vmatprep.subr.mxu0 0.0
  %2737 = vmatpush1.msra.mxu0 0.0
  %2738 = vmatprep.subr.mxu0 0.0
  %2739 = vmatpush1.msra.mxu0 0.0
  %2740 = vmatprep.subr.mxu0 0.0
  %2741 = vmatpush1.msra.mxu0 0.0
  %2742 = vmatprep.subr.mxu0 0.0
  %2743 = vmatpush1.msra.mxu0 0.0
  %2744 = vmatprep.subr.mxu0 0.0
  %2745 = vmatpush1.msra.mxu0 0.0
  %2746 = vmatprep.mubr.f32.mxu0 0.0
  %2747 = vmatmul.mubr.f32.gmra.mrb[0].mxu0 %v2680
  %v2748 = vpop.f32.mrb[0].mxu0
  %v2749 = vadd.f32 %v2678, %v2748
  %v2750 = vpop.f32.mrb[0].mxu0
  %2751 = vdwg.mxu0
  %v2752 = vtanh.pop %v2749
  %v2753 = vadd.f32 %v2752, 1.0
  %v2754 = vmul.f32 %v2753, 6.0
  %v2755 = vadd.f32 %v2754, -10.0
  %v2756 = vmul.f32 %v2755, 1.442695
  %v2757 = vpow.pop %v2756
  %v2758 = vld [vmem:[%s4] sm:$0x3]
  %2760 = vrot.lane.b32.xlu0 %v2757, 124
  %v2761 = vpop.permute.xlu0 %2760
  %v2763 = vmul.f32 %v2758, %v2761
  %v2764 = vadd.f32 %v2749, %v2763
  %v2765 = vmul.f32 %v2758, -0.5
  %v2766 = vmul.f32 %v2765, %v2758
  %2768 = vrot.lane.b32.xlu0 %v2755, 124
  %v2769 = vpop.permute.xlu0 %2768
  %v2771 = vsub.f32 %v2766, %v2769
  %vm2772 = vcmask 25600
  %v2773 = vsel %vm2772, %v2771, 0.0
  %2774 = vadd.xlane.f32.xlu0 %v2773
  %v2775 = vpop.xlane.xlu0 %2774
  %v2776 = vsub.f32 %v2775, 3.675754
  %v2777 = vtanh.pop %v2764
  %v2778 = vmul.f32 %v2777, %v2777
  %v2779 = vsub.f32 1.0, %v2778
  %v2780 = vmax.f32 %v2779, 0.0
  %v2781 = vadd.f32 %v2780, 1e-06
  %v2782 = vlog2.pop %v2781
  %v2783 = vmul.f32 %v2782, 0.6931472
  %v2784 = vsel %vm2772, %v2783, 0.0
  %2785 = vadd.xlane.f32.xlu0 %v2784
  %v2786 = vpop.xlane.xlu0 %2785
  %v2787 = vsub.f32 %v2776, %v2786
  %2789 = vrot.lane.b32.xlu0 %v2777, 4
  %v2790 = vpop.permute.xlu0 %2789
  %2792 = vrot.lane.b32.xlu0 %v2755, 4
  %v2793 = vpop.permute.xlu0 %2792
  %vm2795 = vcmask 31744
  %v2796 = vsel %vm2795, %v2752, %v2790
  %v2797 = vsel %vm2276, %v2796, %v2793
  %vm2798 = vcmask 97280
  %v2799 = vsel %vm2798, %v2797, %v2787
  %vm2800 = vcmask 105472
  %v2801 = vsel %vm2800, %v2799, 0.0
  %2802 = vst [vmem:[%s5] sm:$0x3] %v2801
  // Predicated region
  $region22: #{actor_forward.1} parent=0 // pred_check
    _
  $region23: #{actor_forward.1} parent=0 // pred_check_branch
    %2804 = sbr.rel (0) target = $region25
  $region24: #{actor_forward.1} parent=0 // pred_region
    _
  $region25: #{actor_forward.1} parent=0 // pred_fallthru
    _
  // Predicated region
  $region26: #{actor_forward.1} parent=0 // pred_check
    _
  $region27: #{actor_forward.1} parent=0 // pred_check_branch
    %2806 = sbr.rel (0) target = $region29
  $region28: #{actor_forward.1} parent=0 // pred_region
    _
  $region29: #{actor_forward.1} parent=0 // pred_fallthru
    _

</llo_original>
